<compile_context>
chip_gen: v6e
topology: v6e:2x2x1
jax: 0.10.0
libtpu: 0.0.40
codegen_flags: <defaults>
</compile_context>

<pallas_src>
import functools

import jax
import jax.numpy as jnp
from jax.experimental import pallas as pl
from jax.experimental.pallas import tpu as pltpu


def _round_up(x, m):
    return ((x + m - 1) // m) * m


def _pad_to(a, shape):
    pads = [(0, s - d) for d, s in zip(a.shape, shape)]
    if all(p == (0, 0) for p in pads):
        return a
    return jnp.pad(a, pads)


def _default_b_blk(B):
    """Batch rows per grid block.

    v7x has 2 TensorCores: splitting the batch across the "parallel" grid axis
    lights up the second core.  On single-core chips (v5e/v6e) splitting only
    adds serial grid overhead, so the full batch stays in one block.
    """
    cores = 1
    try:
        info = pltpu.get_tpu_info()
        for name in ("num_tensorcores", "tensorcores_per_chip", "num_cores",
                     "cores_per_chip"):
            v = getattr(info, name, None)
            if isinstance(v, int) and v > 0:
                cores = v
                break
    except Exception:  # defensive: fall back to single-core behaviour
        cores = 1
    if cores < 2 or B < 16:
        return B
    return _round_up(-(-B // cores), 8)


def _rnn_kernel(x_ref, h0_ref, wih_t_ref, whh_t_ref, bias_ref,
                states_ref, h_scratch, *, t_blk):
    """Grid = (batch_blocks, time_blocks).

    NOTE: time (axis 1) MUST remain the innermost, "arbitrary" grid axis:
    h_scratch carries the hidden state across time blocks and is
    re-initialised at t == 0 for every batch block.

    x_ref      : (b_blk, t_blk, Ip)  input block (original dtype)
    h0_ref     : (b_blk, Hp)         initial hidden (f32)
    wih_t_ref  : (Ip, Hp)            W_ih.T, resident, bf16
    whh_t_ref  : (Hp, Hp)            W_hh.T, resident, bf16
    bias_ref   : (1, Hp)             b_ih + b_hh, resident, f32
    states_ref : (b_blk, t_blk, Hp)  hidden states for this time block
    h_scratch  : VMEM (b_blk, Hp)    hidden carried across time blocks (f32)
    """
    t = pl.program_id(1)

    @pl.when(t == 0)
    def _():
        h_scratch[...] = h0_ref[...].astype(jnp.float32)

    # Resident operands: loaded once per grid step (constant index maps).
    wih_t = wih_t_ref[...]                                     # (Ip, Hp) bf16
    whh_t = whh_t_ref[...]                                     # (Hp, Hp) bf16
    bias = jnp.broadcast_to(bias_ref[...].astype(jnp.float32),
                            h_scratch.shape)                   # hoisted broadcast

    h = h_scratch[...]                                         # (b_blk, Hp) f32

    # Static unroll (t_blk is small).  The x @ W_ih.T projection does not
    # depend on h, so the scheduler can issue it ahead of / overlap it with the
    # serial recurrent dot -> tanh chain; only h @ W_hh.T + tanh is serial.
    # TODO(synk): if t_blk is raised above ~16, switch to
    # lax.fori_loop(..., unroll=2..4) with pl.ds indexing to bound live ranges.
    for i in range(t_blk):
        xw = jnp.dot(x_ref[:, i, :].astype(jnp.bfloat16), wih_t,
                     preferred_element_type=jnp.float32) + bias
        pre = xw + jnp.dot(h.astype(jnp.bfloat16), whh_t,
                           preferred_element_type=jnp.float32)
        h = jnp.tanh(pre)
        states_ref[:, i, :] = h.astype(states_ref.dtype)

    h_scratch[...] = h


def rnn_forward(x, h0, w_ih, w_hh, b_ih, b_hh, *, t_blk=8, b_blk=None):
    """x: (B, S, I), h0: (B, H), w_ih: (H, I), w_hh: (H, H), b_*: (H,).

    Returns (states, h_last) with states: (B, S, H), h_last: (B, H), matching
    the PyTorch RNN module's forward.

    t_blk: time steps per grid iteration (multiple of 8).  8-16 recommended on
           v7x (64 MiB VMEM); 16-32 on v5e/v6e (128 MiB VMEM).
    b_blk: batch rows per grid block.  Default: full batch on single-core
           chips; ~B/num_cores (rounded to 8) when >=2 TensorCores (v7x).
    """
    B, S, I = x.shape
    H = h0.shape[-1]
    out_dtype = x.dtype

    if b_blk is None:
        b_blk = _default_b_blk(B)
    if t_blk % 8 != 0:
        raise ValueError("t_blk must be a multiple of 8")

    H_pad = _round_up(H, 128)          # lane-dense hidden dim
    I_pad = _round_up(I, 128)          # lane-dense input dim
    S_pad = _round_up(S, t_blk)        # whole number of time blocks
    B_pad = _round_up(B, b_blk)        # whole number of batch blocks
    if B_pad != b_blk and b_blk % 8 != 0:
        raise ValueError("b_blk must be a multiple of 8 when the batch is split")

    # Zero padding keeps the padded hidden/input columns exactly zero through
    # the recurrence (zero weights, zero bias, tanh(0) == 0), so slicing them
    # off afterwards is exact.  Single jnp.pad per operand (no zeros+set pass).
    x_p = _pad_to(x, (B_pad, S_pad, I_pad))
    h0_p = _pad_to(h0.astype(jnp.float32), (B_pad, H_pad))
    # bf16 MXU operands; accumulation stays f32 inside the kernel.
    wih_t_p = _pad_to(jnp.transpose(w_ih, (1, 0)).astype(jnp.bfloat16),
                      (I_pad, H_pad))
    whh_t_p = _pad_to(jnp.transpose(w_hh, (1, 0)).astype(jnp.bfloat16),
                      (H_pad, H_pad))
    bias_p = _pad_to((b_ih.astype(jnp.float32)
                      + b_hh.astype(jnp.float32))[None, :], (1, H_pad))

    n_b = B_pad // b_blk
    n_t = S_pad // t_blk
    x_isz = jnp.dtype(x.dtype).itemsize
    out_isz = jnp.dtype(out_dtype).itemsize

    grid_spec = pltpu.PrefetchScalarGridSpec(
        num_scalar_prefetch=0,
        grid=(n_b, n_t),                                        # (batch, time)
        in_specs=[
            pl.BlockSpec((b_blk, t_blk, I_pad), lambda b, t: (b, t, 0)),  # x
            pl.BlockSpec((b_blk, H_pad), lambda b, t: (b, 0)),            # h0
            pl.BlockSpec((I_pad, H_pad), lambda b, t: (0, 0)),            # W_ih.T
            pl.BlockSpec((H_pad, H_pad), lambda b, t: (0, 0)),            # W_hh.T
            pl.BlockSpec((1, H_pad), lambda b, t: (0, 0)),                # bias
            # TODO(synk): for very large H on v7x, add
            # pipeline_mode=pl.Buffered(1) to the resident W/h0/bias specs to
            # drop their second pipeline buffer under the 64 MiB VMEM budget.
        ],
        out_specs=pl.BlockSpec((b_blk, t_blk, H_pad), lambda b, t: (b, t, 0)),
        scratch_shapes=[pltpu.VMEM((b_blk, H_pad), jnp.float32)],
    )

    # VMEM budget: double-buffered streamed blocks + (double-buffered) resident
    # operands + scratch.  Raise the scoped limit only when actually needed.
    blk_bytes = b_blk * t_blk * (I_pad * x_isz + H_pad * out_isz)
    res_bytes = (I_pad + H_pad) * H_pad * 2 + (b_blk + 1) * H_pad * 4
    vmem_need = 2 * blk_bytes + 2 * res_bytes + b_blk * H_pad * 4
    vmem_limit = None
    if vmem_need > (24 << 20):
        vmem_limit = min(int(vmem_need * 5 // 4) + (2 << 20), 112 << 20)

    cost = pl.CostEstimate(
        flops=int(2 * B_pad * S_pad * H_pad * (H_pad + I_pad)
                  + 3 * B_pad * S_pad * H_pad),
        transcendentals=int(B_pad * S_pad * H_pad),
        bytes_accessed=int(B_pad * S_pad * (I_pad * x_isz + H_pad * out_isz)
                           + B_pad * H_pad * 4
                           + (I_pad + H_pad) * H_pad * 2
                           + H_pad * 4),
    )

    states_p = pl.pallas_call(
        functools.partial(_rnn_kernel, t_blk=t_blk),
        out_shape=jax.ShapeDtypeStruct((B_pad, S_pad, H_pad), out_dtype),
        grid_spec=grid_spec,
        compiler_params=pltpu.CompilerParams(
            dimension_semantics=("parallel", "arbitrary"),  # batch ||, time seq
            vmem_limit_bytes=vmem_limit,
        ),
        cost_estimate=cost,
    )(x_p, h0_p, wih_t_p, whh_t_p, bias_p)

    states = states_p[:B, :S, :H]
    h_last = states_p[:B, S - 1, :H]
    return states, h_last


def rnn_reference(x, h0, w_ih, w_hh, b_ih, b_hh):
    """Pure-f32 JAX reference mirroring the PyTorch module exactly."""
    def step(h, x_t):
        h_new = jnp.tanh(x_t @ w_ih.T + b_ih + h @ w_hh.T + b_hh)
        return h_new, h_new
    x_tm = jnp.transpose(x, (1, 0, 2))            # (S, B, I)
    h_last, states_tm = jax.lax.scan(step, h0, x_tm)
    return jnp.transpose(states_tm, (1, 0, 2)), h_last


def rnn_reference_mxu(x, h0, w_ih, w_hh, b_ih, b_hh):
    """Reference with the kernel's dtype policy: bf16 MXU operands, f32 accum."""
    wih_t = jnp.transpose(w_ih, (1, 0)).astype(jnp.bfloat16)
    whh_t = jnp.transpose(w_hh, (1, 0)).astype(jnp.bfloat16)
    bias = b_ih.astype(jnp.float32) + b_hh.astype(jnp.float32)

    def step(h, x_t):
        pre = (jnp.dot(x_t.astype(jnp.bfloat16), wih_t,
                       preferred_element_type=jnp.float32) + bias
               + jnp.dot(h.astype(jnp.bfloat16), whh_t,
                         preferred_element_type=jnp.float32))
        h_new = jnp.tanh(pre)
        return h_new, h_new

    x_tm = jnp.transpose(x, (1, 0, 2))
    h_last, states_tm = jax.lax.scan(step, h0.astype(jnp.float32), x_tm)
    return (jnp.transpose(states_tm, (1, 0, 2)).astype(x.dtype),
            h_last.astype(x.dtype))


if __name__ == "__main__":
    B, S, I, H = 2, 8, 16, 32
    key = jax.random.PRNGKey(0)
    kx, kh, k1, k2, k3, k4 = jax.random.split(key, 6)

    x = jax.random.normal(kx, (B, S, I), dtype=jnp.float32)
    h0 = jax.random.normal(kh, (B, H), dtype=jnp.float32)

    # Deterministic synthetic parameters for the RNN cell (nn.RNNCell shapes).
    scale = 1.0 / jnp.sqrt(H).astype(jnp.float32)
    w_ih = scale * jax.random.normal(k1, (H, I), dtype=jnp.float32)
    w_hh = scale * jax.random.normal(k2, (H, H), dtype=jnp.float32)
    b_ih = scale * jax.random.normal(k3, (H,), dtype=jnp.float32)
    b_hh = scale * jax.random.normal(k4, (H,), dtype=jnp.float32)

    states, h_last = rnn_forward(x, h0, w_ih, w_hh, b_ih, b_hh)
    jax.block_until_ready((states, h_last))

    assert states.shape == (B, S, H) and h_last.shape == (B, H)

    # Tight check vs. a reference using the kernel's exact dtype policy
    # (bf16 MXU operands, f32 accumulation / carry).
    mxu_states, mxu_h = rnn_reference_mxu(x, h0, w_ih, w_hh, b_ih, b_hh)
    assert jnp.allclose(states, mxu_states, atol=2e-3, rtol=2e-3)
    assert jnp.allclose(h_last, mxu_h, atol=2e-3, rtol=2e-3)

    # Loose sanity check vs. the pure-f32 PyTorch-equivalent reference
    # (intentional bf16-MXU precision trade; accumulation stays f32).
    ref_states, ref_h = rnn_reference(x, h0, w_ih, w_hh, b_ih, b_hh)
    assert jnp.allclose(states, ref_states, atol=1e-1, rtol=1e-1)
    assert jnp.allclose(h_last, ref_h, atol=1e-1, rtol=1e-1)

    print("KERNEL_OK")
</pallas_src>

<mosaic_0001>
module attributes {stable_mosaic.version = 11 : i64} {
  func.func @_rnn_kernel(%arg0: i32, %arg1: i32, %arg2: memref<2x8x128xf32, #tpu.memory_space<vmem>>, %arg3: memref<2x128xf32, #tpu.memory_space<vmem>>, %arg4: memref<128x128xbf16, #tpu.memory_space<vmem>>, %arg5: memref<128x128xbf16, #tpu.memory_space<vmem>>, %arg6: memref<1x128xf32, #tpu.memory_space<vmem>>, %arg7: memref<2x8x128xf32, #tpu.memory_space<vmem>>, %arg8: memref<2x128xf32, #tpu.memory_space<vmem>>) attributes {dimension_semantics = [#tpu.dimension_semantics<parallel>, #tpu.dimension_semantics<arbitrary>], iteration_bounds = array<i64: 1, 1>, scalar_prefetch = 0 : i64, scratch_operands = 1 : i64, tpu.core_type = #tpu.core_type<tc>, window_params = [{transform_indices = @transform_0, window_bounds = array<i64: 2, 8, 128>}, {transform_indices = @transform_1, window_bounds = array<i64: 2, 128>}, {pipeline_mode = #tpu.pipeline_mode<synchronous>, transform_indices = @transform_2, window_bounds = array<i64: 128, 128>}, {pipeline_mode = #tpu.pipeline_mode<synchronous>, transform_indices = @transform_3, window_bounds = array<i64: 128, 128>}, {pipeline_mode = #tpu.pipeline_mode<synchronous>, transform_indices = @transform_4, window_bounds = array<i64: 1, 128>}, {transform_indices = @transform_5, window_bounds = array<i64: 2, 8, 128>}]} {
    %c0_i32 = arith.constant 0 : i32
    %0 = arith.cmpi eq, %arg1, %c0_i32 : i32
    %1 = arith.extui %0 : i1 to i32
    %c0_i32_0 = arith.constant 0 : i32
    %2 = arith.cmpi ne, %1, %c0_i32_0 : i32
    scf.if %2 {
      %c0_66 = arith.constant 0 : index
      %c0_67 = arith.constant 0 : index
      %106 = vector.load %arg3[%c0_66, %c0_67] : memref<2x128xf32, #tpu.memory_space<vmem>>, vector<2x128xf32>
      %c0_68 = arith.constant 0 : index
      %c0_69 = arith.constant 0 : index
      %107 = vector.load %arg8[%c0_68, %c0_69] : memref<2x128xf32, #tpu.memory_space<vmem>>, vector<2x128xf32>
      tpu.vector_store %arg8[%c0_68, %c0_69], %106 {strides = array<i32>} : memref<2x128xf32, #tpu.memory_space<vmem>>, vector<2x128xf32>,
    } else {
    }
    %c0 = arith.constant 0 : index
    %c0_1 = arith.constant 0 : index
    %3 = vector.load %arg4[%c0, %c0_1] : memref<128x128xbf16, #tpu.memory_space<vmem>>, vector<128x128xbf16>
    %c0_2 = arith.constant 0 : index
    %c0_3 = arith.constant 0 : index
    %4 = vector.load %arg5[%c0_2, %c0_3] : memref<128x128xbf16, #tpu.memory_space<vmem>>, vector<128x128xbf16>
    %c0_4 = arith.constant 0 : index
    %c0_5 = arith.constant 0 : index
    %5 = vector.load %arg6[%c0_4, %c0_5] : memref<1x128xf32, #tpu.memory_space<vmem>>, vector<1x128xf32>
    %6 = vector.shape_cast %5 : vector<1x128xf32> to vector<1x128xf32>
    %7 = vector.broadcast %6 : vector<1x128xf32> to vector<2x128xf32>
    %c0_6 = arith.constant 0 : index
    %c0_7 = arith.constant 0 : index
    %8 = vector.load %arg8[%c0_6, %c0_7] : memref<2x128xf32, #tpu.memory_space<vmem>>, vector<2x128xf32>
    %c0_8 = arith.constant 0 : index
    %c0_9 = arith.constant 0 : index
    %c0_10 = arith.constant 0 : index
    %9 = vector.load %arg2[%c0_8, %c0_9, %c0_10] : memref<2x8x128xf32, #tpu.memory_space<vmem>>, vector<2x1x128xf32>
    %10 = vector.shape_cast %9 : vector<2x1x128xf32> to vector<2x128xf32>
    %11 = arith.truncf %10 : vector<2x128xf32> to vector<2x128xbf16>
    %cst = arith.constant dense<0.000000e+00> : vector<2x128xf32>
    %12 = tpu.matmul %11, %3, %cst {dimension_numbers = #tpu.dot_dimension_numbers<[1], [0], [0], [1], [0, 0, 1, 1], [], []>} : vector<2x128xbf16>, vector<128x128xbf16>, vector<2x128xf32> -> vector<2x128xf32>
    %13 = arith.addf %12, %7 : vector<2x128xf32>
    %14 = arith.truncf %8 : vector<2x128xf32> to vector<2x128xbf16>
    %cst_11 = arith.constant dense<0.000000e+00> : vector<2x128xf32>
    %15 = tpu.matmul %14, %4, %cst_11 {dimension_numbers = #tpu.dot_dimension_numbers<[1], [0], [0], [1], [0, 0, 1, 1], [], []>} : vector<2x128xbf16>, vector<128x128xbf16>, vector<2x128xf32> -> vector<2x128xf32>
    %16 = arith.addf %13, %15 : vector<2x128xf32>
    %17 = math.tanh %16 : vector<2x128xf32>
    %c0_12 = arith.constant 0 : index
    %c0_13 = arith.constant 0 : index
    %c0_14 = arith.constant 0 : index
    %18 = vector.load %arg7[%c0_12, %c0_13, %c0_14] : memref<2x8x128xf32, #tpu.memory_space<vmem>>, vector<2x1x128xf32>
    %19 = vector.shape_cast %18 : vector<2x1x128xf32> to vector<2x128xf32>
    %20 = vector.shape_cast %17 : vector<2x128xf32> to vector<2x1x128xf32>
    tpu.vector_store %arg7[%c0_12, %c0_13, %c0_14], %20 {strides = array<i32>} : memref<2x8x128xf32, #tpu.memory_space<vmem>>, vector<2x1x128xf32>,
    %c0_15 = arith.constant 0 : index
    %c1 = arith.constant 1 : index
    %c0_16 = arith.constant 0 : index
    %21 = vector.load %arg2[%c0_15, %c1, %c0_16] : memref<2x8x128xf32, #tpu.memory_space<vmem>>, vector<2x1x128xf32>
    %22 = vector.shape_cast %21 : vector<2x1x128xf32> to vector<2x128xf32>
    %23 = arith.truncf %22 : vector<2x128xf32> to vector<2x128xbf16>
    %cst_17 = arith.constant dense<0.000000e+00> : vector<2x128xf32>
    %24 = tpu.matmul %23, %3, %cst_17 {dimension_numbers = #tpu.dot_dimension_numbers<[1], [0], [0], [1], [0, 0, 1, 1], [], []>} : vector<2x128xbf16>, vector<128x128xbf16>, vector<2x128xf32> -> vector<2x128xf32>
    %25 = arith.addf %24, %7 : vector<2x128xf32>
    %26 = arith.truncf %17 : vector<2x128xf32> to vector<2x128xbf16>
    %cst_18 = arith.constant dense<0.000000e+00> : vector<2x128xf32>
    %27 = tpu.matmul %26, %4, %cst_18 {dimension_numbers = #tpu.dot_dimension_numbers<[1], [0], [0], [1], [0, 0, 1, 1], [], []>} : vector<2x128xbf16>, vector<128x128xbf16>, vector<2x128xf32> -> vector<2x128xf32>
    %28 = arith.addf %25, %27 : vector<2x128xf32>
    %29 = math.tanh %28 : vector<2x128xf32>
    %c0_19 = arith.constant 0 : index
    %c1_20 = arith.constant 1 : index
    %c0_21 = arith.constant 0 : index
    %30 = vector.load %arg7[%c0_19, %c1_20, %c0_21] : memref<2x8x128xf32, #tpu.memory_space<vmem>>, vector<2x1x128xf32>
    %31 = vector.shape_cast %30 : vector<2x1x128xf32> to vector<2x128xf32>
    %32 = vector.shape_cast %29 : vector<2x128xf32> to vector<2x1x128xf32>
    tpu.vector_store %arg7[%c0_19, %c1_20, %c0_21], %32 {strides = array<i32>} : memref<2x8x128xf32, #tpu.memory_space<vmem>>, vector<2x1x128xf32>,
    %c0_22 = arith.constant 0 : index
    %c2 = arith.constant 2 : index
    %c0_23 = arith.constant 0 : index
    %33 = vector.load %arg2[%c0_22, %c2, %c0_23] : memref<2x8x128xf32, #tpu.memory_space<vmem>>, vector<2x1x128xf32>
    %34 = vector.shape_cast %33 : vector<2x1x128xf32> to vector<2x128xf32>
    %35 = arith.truncf %34 : vector<2x128xf32> to vector<2x128xbf16>
    %cst_24 = arith.constant dense<0.000000e+00> : vector<2x128xf32>
    %36 = tpu.matmul %35, %3, %cst_24 {dimension_numbers = #tpu.dot_dimension_numbers<[1], [0], [0], [1], [0, 0, 1, 1], [], []>} : vector<2x128xbf16>, vector<128x128xbf16>, vector<2x128xf32> -> vector<2x128xf32>
    %37 = arith.addf %36, %7 : vector<2x128xf32>
    %38 = arith.truncf %29 : vector<2x128xf32> to vector<2x128xbf16>
    %cst_25 = arith.constant dense<0.000000e+00> : vector<2x128xf32>
    %39 = tpu.matmul %38, %4, %cst_25 {dimension_numbers = #tpu.dot_dimension_numbers<[1], [0], [0], [1], [0, 0, 1, 1], [], []>} : vector<2x128xbf16>, vector<128x128xbf16>, vector<2x128xf32> -> vector<2x128xf32>
    %40 = arith.addf %37, %39 : vector<2x128xf32>
    %41 = math.tanh %40 : vector<2x128xf32>
    %c0_26 = arith.constant 0 : index
    %c2_27 = arith.constant 2 : index
    %c0_28 = arith.constant 0 : index
    %42 = vector.load %arg7[%c0_26, %c2_27, %c0_28] : memref<2x8x128xf32, #tpu.memory_space<vmem>>, vector<2x1x128xf32>
    %43 = vector.shape_cast %42 : vector<2x1x128xf32> to vector<2x128xf32>
    %44 = vector.shape_cast %41 : vector<2x128xf32> to vector<2x1x128xf32>
    tpu.vector_store %arg7[%c0_26, %c2_27, %c0_28], %44 {strides = array<i32>} : memref<2x8x128xf32, #tpu.memory_space<vmem>>, vector<2x1x128xf32>,
    %c0_29 = arith.constant 0 : index
    %c3 = arith.constant 3 : index
    %c0_30 = arith.constant 0 : index
    %45 = vector.load %arg2[%c0_29, %c3, %c0_30] : memref<2x8x128xf32, #tpu.memory_space<vmem>>, vector<2x1x128xf32>
    %46 = vector.shape_cast %45 : vector<2x1x128xf32> to vector<2x128xf32>
    %47 = arith.truncf %46 : vector<2x128xf32> to vector<2x128xbf16>
    %cst_31 = arith.constant dense<0.000000e+00> : vector<2x128xf32>
    %48 = tpu.matmul %47, %3, %cst_31 {dimension_numbers = #tpu.dot_dimension_numbers<[1], [0], [0], [1], [0, 0, 1, 1], [], []>} : vector<2x128xbf16>, vector<128x128xbf16>, vector<2x128xf32> -> vector<2x128xf32>
    %49 = arith.addf %48, %7 : vector<2x128xf32>
    %50 = arith.truncf %41 : vector<2x128xf32> to vector<2x128xbf16>
    %cst_32 = arith.constant dense<0.000000e+00> : vector<2x128xf32>
    %51 = tpu.matmul %50, %4, %cst_32 {dimension_numbers = #tpu.dot_dimension_numbers<[1], [0], [0], [1], [0, 0, 1, 1], [], []>} : vector<2x128xbf16>, vector<128x128xbf16>, vector<2x128xf32> -> vector<2x128xf32>
    %52 = arith.addf %49, %51 : vector<2x128xf32>
    %53 = math.tanh %52 : vector<2x128xf32>
    %c0_33 = arith.constant 0 : index
    %c3_34 = arith.constant 3 : index
    %c0_35 = arith.constant 0 : index
    %54 = vector.load %arg7[%c0_33, %c3_34, %c0_35] : memref<2x8x128xf32, #tpu.memory_space<vmem>>, vector<2x1x128xf32>
    %55 = vector.shape_cast %54 : vector<2x1x128xf32> to vector<2x128xf32>
    %56 = vector.shape_cast %53 : vector<2x128xf32> to vector<2x1x128xf32>
    tpu.vector_store %arg7[%c0_33, %c3_34, %c0_35], %56 {strides = array<i32>} : memref<2x8x128xf32, #tpu.memory_space<vmem>>, vector<2x1x128xf32>,
    %c0_36 = arith.constant 0 : index
    %c4 = arith.constant 4 : index
    %c0_37 = arith.constant 0 : index
    %57 = vector.load %arg2[%c0_36, %c4, %c0_37] : memref<2x8x128xf32, #tpu.memory_space<vmem>>, vector<2x1x128xf32>
    %58 = vector.shape_cast %57 : vector<2x1x128xf32> to vector<2x128xf32>
    %59 = arith.truncf %58 : vector<2x128xf32> to vector<2x128xbf16>
    %cst_38 = arith.constant dense<0.000000e+00> : vector<2x128xf32>
    %60 = tpu.matmul %59, %3, %cst_38 {dimension_numbers = #tpu.dot_dimension_numbers<[1], [0], [0], [1], [0, 0, 1, 1], [], []>} : vector<2x128xbf16>, vector<128x128xbf16>, vector<2x128xf32> -> vector<2x128xf32>
    %61 = arith.addf %60, %7 : vector<2x128xf32>
    %62 = arith.truncf %53 : vector<2x128xf32> to vector<2x128xbf16>
    %cst_39 = arith.constant dense<0.000000e+00> : vector<2x128xf32>
    %63 = tpu.matmul %62, %4, %cst_39 {dimension_numbers = #tpu.dot_dimension_numbers<[1], [0], [0], [1], [0, 0, 1, 1], [], []>} : vector<2x128xbf16>, vector<128x128xbf16>, vector<2x128xf32> -> vector<2x128xf32>
    %64 = arith.addf %61, %63 : vector<2x128xf32>
    %65 = math.tanh %64 : vector<2x128xf32>
    %c0_40 = arith.constant 0 : index
    %c4_41 = arith.constant 4 : index
    %c0_42 = arith.constant 0 : index
    %66 = vector.load %arg7[%c0_40, %c4_41, %c0_42] : memref<2x8x128xf32, #tpu.memory_space<vmem>>, vector<2x1x128xf32>
    %67 = vector.shape_cast %66 : vector<2x1x128xf32> to vector<2x128xf32>
    %68 = vector.shape_cast %65 : vector<2x128xf32> to vector<2x1x128xf32>
    tpu.vector_store %arg7[%c0_40, %c4_41, %c0_42], %68 {strides = array<i32>} : memref<2x8x128xf32, #tpu.memory_space<vmem>>, vector<2x1x128xf32>,
    %c0_43 = arith.constant 0 : index
    %c5 = arith.constant 5 : index
    %c0_44 = arith.constant 0 : index
    %69 = vector.load %arg2[%c0_43, %c5, %c0_44] : memref<2x8x128xf32, #tpu.memory_space<vmem>>, vector<2x1x128xf32>
    %70 = vector.shape_cast %69 : vector<2x1x128xf32> to vector<2x128xf32>
    %71 = arith.truncf %70 : vector<2x128xf32> to vector<2x128xbf16>
    %cst_45 = arith.constant dense<0.000000e+00> : vector<2x128xf32>
    %72 = tpu.matmul %71, %3, %cst_45 {dimension_numbers = #tpu.dot_dimension_numbers<[1], [0], [0], [1], [0, 0, 1, 1], [], []>} : vector<2x128xbf16>, vector<128x128xbf16>, vector<2x128xf32> -> vector<2x128xf32>
    %73 = arith.addf %72, %7 : vector<2x128xf32>
    %74 = arith.truncf %65 : vector<2x128xf32> to vector<2x128xbf16>
    %cst_46 = arith.constant dense<0.000000e+00> : vector<2x128xf32>
    %75 = tpu.matmul %74, %4, %cst_46 {dimension_numbers = #tpu.dot_dimension_numbers<[1], [0], [0], [1], [0, 0, 1, 1], [], []>} : vector<2x128xbf16>, vector<128x128xbf16>, vector<2x128xf32> -> vector<2x128xf32>
    %76 = arith.addf %73, %75 : vector<2x128xf32>
    %77 = math.tanh %76 : vector<2x128xf32>
    %c0_47 = arith.constant 0 : index
    %c5_48 = arith.constant 5 : index
    %c0_49 = arith.constant 0 : index
    %78 = vector.load %arg7[%c0_47, %c5_48, %c0_49] : memref<2x8x128xf32, #tpu.memory_space<vmem>>, vector<2x1x128xf32>
    %79 = vector.shape_cast %78 : vector<2x1x128xf32> to vector<2x128xf32>
    %80 = vector.shape_cast %77 : vector<2x128xf32> to vector<2x1x128xf32>
    tpu.vector_store %arg7[%c0_47, %c5_48, %c0_49], %80 {strides = array<i32>} : memref<2x8x128xf32, #tpu.memory_space<vmem>>, vector<2x1x128xf32>,
    %c0_50 = arith.constant 0 : index
    %c6 = arith.constant 6 : index
    %c0_51 = arith.constant 0 : index
    %81 = vector.load %arg2[%c0_50, %c6, %c0_51] : memref<2x8x128xf32, #tpu.memory_space<vmem>>, vector<2x1x128xf32>
    %82 = vector.shape_cast %81 : vector<2x1x128xf32> to vector<2x128xf32>
    %83 = arith.truncf %82 : vector<2x128xf32> to vector<2x128xbf16>
    %cst_52 = arith.constant dense<0.000000e+00> : vector<2x128xf32>
    %84 = tpu.matmul %83, %3, %cst_52 {dimension_numbers = #tpu.dot_dimension_numbers<[1], [0], [0], [1], [0, 0, 1, 1], [], []>} : vector<2x128xbf16>, vector<128x128xbf16>, vector<2x128xf32> -> vector<2x128xf32>
    %85 = arith.addf %84, %7 : vector<2x128xf32>
    %86 = arith.truncf %77 : vector<2x128xf32> to vector<2x128xbf16>
    %cst_53 = arith.constant dense<0.000000e+00> : vector<2x128xf32>
    %87 = tpu.matmul %86, %4, %cst_53 {dimension_numbers = #tpu.dot_dimension_numbers<[1], [0], [0], [1], [0, 0, 1, 1], [], []>} : vector<2x128xbf16>, vector<128x128xbf16>, vector<2x128xf32> -> vector<2x128xf32>
    %88 = arith.addf %85, %87 : vector<2x128xf32>
    %89 = math.tanh %88 : vector<2x128xf32>
    %c0_54 = arith.constant 0 : index
    %c6_55 = arith.constant 6 : index
    %c0_56 = arith.constant 0 : index
    %90 = vector.load %arg7[%c0_54, %c6_55, %c0_56] : memref<2x8x128xf32, #tpu.memory_space<vmem>>, vector<2x1x128xf32>
    %91 = vector.shape_cast %90 : vector<2x1x128xf32> to vector<2x128xf32>
    %92 = vector.shape_cast %89 : vector<2x128xf32> to vector<2x1x128xf32>
    tpu.vector_store %arg7[%c0_54, %c6_55, %c0_56], %92 {strides = array<i32>} : memref<2x8x128xf32, #tpu.memory_space<vmem>>, vector<2x1x128xf32>,
    %c0_57 = arith.constant 0 : index
    %c7 = arith.constant 7 : index
    %c0_58 = arith.constant 0 : index
    %93 = vector.load %arg2[%c0_57, %c7, %c0_58] : memref<2x8x128xf32, #tpu.memory_space<vmem>>, vector<2x1x128xf32>
    %94 = vector.shape_cast %93 : vector<2x1x128xf32> to vector<2x128xf32>
    %95 = arith.truncf %94 : vector<2x128xf32> to vector<2x128xbf16>
    %cst_59 = arith.constant dense<0.000000e+00> : vector<2x128xf32>
    %96 = tpu.matmul %95, %3, %cst_59 {dimension_numbers = #tpu.dot_dimension_numbers<[1], [0], [0], [1], [0, 0, 1, 1], [], []>} : vector<2x128xbf16>, vector<128x128xbf16>, vector<2x128xf32> -> vector<2x128xf32>
    %97 = arith.addf %96, %7 : vector<2x128xf32>
    %98 = arith.truncf %89 : vector<2x128xf32> to vector<2x128xbf16>
    %cst_60 = arith.constant dense<0.000000e+00> : vector<2x128xf32>
    %99 = tpu.matmul %98, %4, %cst_60 {dimension_numbers = #tpu.dot_dimension_numbers<[1], [0], [0], [1], [0, 0, 1, 1], [], []>} : vector<2x128xbf16>, vector<128x128xbf16>, vector<2x128xf32> -> vector<2x128xf32>
    %100 = arith.addf %97, %99 : vector<2x128xf32>
    %101 = math.tanh %100 : vector<2x128xf32>
    %c0_61 = arith.constant 0 : index
    %c7_62 = arith.constant 7 : index
    %c0_63 = arith.constant 0 : index
    %102 = vector.load %arg7[%c0_61, %c7_62, %c0_63] : memref<2x8x128xf32, #tpu.memory_space<vmem>>, vector<2x1x128xf32>
    %103 = vector.shape_cast %102 : vector<2x1x128xf32> to vector<2x128xf32>
    %104 = vector.shape_cast %101 : vector<2x128xf32> to vector<2x1x128xf32>
    tpu.vector_store %arg7[%c0_61, %c7_62, %c0_63], %104 {strides = array<i32>} : memref<2x8x128xf32, #tpu.memory_space<vmem>>, vector<2x1x128xf32>,
    %c0_64 = arith.constant 0 : index
    %c0_65 = arith.constant 0 : index
    %105 = vector.load %arg8[%c0_64, %c0_65] : memref<2x128xf32, #tpu.memory_space<vmem>>, vector<2x128xf32>
    tpu.vector_store %arg8[%c0_64, %c0_65], %101 {strides = array<i32>} : memref<2x128xf32, #tpu.memory_space<vmem>>, vector<2x128xf32>,
    return
  }
  func.func @transform_0(%arg0: i32, %arg1: i32) -> (i32, i32, i32) {
    %c0_i32 = arith.constant 0 : i32
    %c0_i32_0 = arith.constant 0 : i32
    return %arg0, %arg1, %c0_i32 : i32, i32, i32
  }
  func.func @transform_1(%arg0: i32, %arg1: i32) -> (i32, i32) {
    %c0_i32 = arith.constant 0 : i32
    %c0_i32_0 = arith.constant 0 : i32
    return %arg0, %c0_i32 : i32, i32
  }
  func.func @transform_2(%arg0: i32, %arg1: i32) -> (i32, i32) {
    %c0_i32 = arith.constant 0 : i32
    %c0_i32_0 = arith.constant 0 : i32
    %c0_i32_1 = arith.constant 0 : i32
    return %c0_i32, %c0_i32_0 : i32, i32
  }
  func.func @transform_3(%arg0: i32, %arg1: i32) -> (i32, i32) {
    %c0_i32 = arith.constant 0 : i32
    %c0_i32_0 = arith.constant 0 : i32
    %c0_i32_1 = arith.constant 0 : i32
    return %c0_i32, %c0_i32_0 : i32, i32
  }
  func.func @transform_4(%arg0: i32, %arg1: i32) -> (i32, i32) {
    %c0_i32 = arith.constant 0 : i32
    %c0_i32_0 = arith.constant 0 : i32
    %c0_i32_1 = arith.constant 0 : i32
    return %c0_i32, %c0_i32_0 : i32, i32
  }
  func.func @transform_5(%arg0: i32, %arg1: i32) -> (i32, i32, i32) {
    %c0_i32 = arith.constant 0 : i32
    %c0_i32_0 = arith.constant 0 : i32
    return %arg0, %arg1, %c0_i32 : i32, i32, i32
  }
}

</mosaic_0001>

<llo_original>
// kernel: tpu_custom_call.1
$region0: #{tpu_custom_call.1}
  #allocation0 [shape = 'u32[]', space=smem, size = 0x4, offset = 0x4, fixed_abs, tag = 'smem constant byte address 0x4 - core index']
  #allocation1 [shape = 'u32[144,128]{1,0:T(1,128)}', space=vmem, size = 0x12000, scoped, tag = 'internal scratch']
  #allocation2 [shape = 'f32[2,128]{1,0:T(2,128)}', space=vmem, size = 0x400, scoped, tag = 'scratch operand']
  %s0 = inlined_call_operand.hbm [shape: f32[2,8,128], index: 0, kind: input, shape index: {}]
  %s1 = inlined_call_operand.hbm [shape: f32[2,128], index: 1, kind: input, shape index: {}]
  %s2 = inlined_call_operand.hbm [shape: bf16[128,128], index: 2, kind: input, shape index: {}]
  %s3 = inlined_call_operand.hbm [shape: bf16[128,128], index: 3, kind: input, shape index: {}]
  %s4 = inlined_call_operand.vmem [shape: f32[1,128], index: 4, kind: input, shape index: {}]
  %s5 = inlined_call_operand.hbm [shape: f32[2,8,128], index: 5, kind: output, shape index: {}]
  %s6 = sld [smem:[#allocation0]]
  $region50: #{tpu_custom_call.1} parent=0
    _
  %s8 = ssub.s32 1, %s6
  %s9 = scalar_select 0, %s8, %s6
  $region1: #{tpu_custom_call.1} parent=0
    #allocation3 [shape = 'u8[8192]{0}', space=vmem, size = 0x2000, scoped, tag = 'input window, operand 0, single buffered']
    #allocation4 [shape = 's32[1]{0}', space=sflag, size = 0x4, scoped, tag = 'scoped memory for tpu_custom_call.1']
    #allocation5 [shape = 's32[1]{0}', space=sflag, size = 0x4, scoped, tag = 'scoped memory for tpu_custom_call.1']
    #allocation6 [shape = 'u8[1024]{0}', space=vmem, size = 0x400, scoped, tag = 'input window, operand 1, single buffered']
    #allocation7 [shape = 's32[1]{0}', space=sflag, size = 0x4, scoped, tag = 'scoped memory for tpu_custom_call.1']
    #allocation8 [shape = 'u8[32768]{0}', space=vmem, size = 0x8000, scoped, tag = 'input window, operand 2, single buffered']
    #allocation9 [shape = 'u8[32768]{0}', space=vmem, size = 0x8000, scoped, tag = 'input window, operand 3, single buffered']
    #allocation10 [shape = 's32[1]{0}', space=sflag, size = 0x4, scoped, tag = 'scoped memory for tpu_custom_call.1']
    #allocation11 [shape = 'u8[8192]{0}', space=vmem, size = 0x2000, scoped, tag = 'output window, operand 0, single buffered']
    %10 = vsyncpa [#allocation4], 0
    %11 = vsyncpa [#allocation7], 0
    %12 = vsyncpa [#allocation10], 0
    %13 = vsyncpa [#allocation5], 0
    // Predicated region
    $region2: #{tpu_custom_call.1} parent=1 // pred_check
      _
    $region3: #{tpu_custom_call.1} parent=1 // pred_check_branch
      %15 = sbr.rel (0) target = $region5
    $region4: #{tpu_custom_call.1} parent=1 // pred_region
      %s17 = ssub.s32 256, 256
      %18 = vsyncadd [#allocation4], %s17
      %s19 = sshll.u32 [#allocation3], 4
      %s20 = int_to_ptr.vmem [resolvable:$true] %s19
      %25 = dma.hbm_to_vmem [thread:$0]  %s0, 256, %s20, [#allocation4], 128, 128, 8
    $region5: #{tpu_custom_call.1} parent=1 // pred_fallthru
      _
    // Predicated region
    $region6: #{tpu_custom_call.1} parent=1 // pred_check
      _
    $region7: #{tpu_custom_call.1} parent=1 // pred_check_branch
      %27 = sbr.rel (0) target = $region9
    $region8: #{tpu_custom_call.1} parent=1 // pred_region
      %s29 = ssub.s32 32, 32
      %30 = vsyncadd [#allocation7], %s29
      %s32 = sshll.u32 [#allocation6], 4
      %s33 = int_to_ptr.vmem [resolvable:$true] %s32
      %35 = dma.hbm_to_vmem [thread:$0]  %s1, 32, %s33, [#allocation7]
    $region9: #{tpu_custom_call.1} parent=1 // pred_fallthru
      _
    // Predicated region
    $region10: #{tpu_custom_call.1} parent=1 // pred_check
      _
    $region11: #{tpu_custom_call.1} parent=1 // pred_check_branch
      %37 = sbr.rel (0) target = $region13
    $region12: #{tpu_custom_call.1} parent=1 // pred_region
      %s39 = ssub.s32 1024, 1024
      %40 = vsyncadd [#allocation7], %s39
      %s41 = sshll.u32 [#allocation8], 4
      %s42 = int_to_ptr.vmem [resolvable:$true] %s41
      %47 = dma.hbm_to_vmem [thread:$0]  %s2, 1024, %s42, [#allocation7], 64, 64, 4
    $region13: #{tpu_custom_call.1} parent=1 // pred_fallthru
      _
    // Predicated region
    $region14: #{tpu_custom_call.1} parent=1 // pred_check
      _
    $region15: #{tpu_custom_call.1} parent=1 // pred_check_branch
      %49 = sbr.rel (0) target = $region17
    $region16: #{tpu_custom_call.1} parent=1 // pred_region
      %s51 = ssub.s32 1024, 1024
      %52 = vsyncadd [#allocation10], %s51
      %s53 = sshll.u32 [#allocation9], 4
      %s54 = int_to_ptr.vmem [resolvable:$true] %s53
      %59 = dma.hbm_to_vmem [thread:$0]  %s3, 1024, %s54, [#allocation10], 64, 64, 4
    $region17: #{tpu_custom_call.1} parent=1 // pred_fallthru
      _
    // Predicated region
    $region18: #{tpu_custom_call.1} parent=1 // pred_check
      _
    $region19: #{tpu_custom_call.1} parent=1 // pred_check_branch
      %61 = sbr.rel (0) target = $region21
    $region20: #{tpu_custom_call.1} parent=1 // pred_region
      _
    $region21: #{tpu_custom_call.1} parent=1 // pred_fallthru
      _
    // Predicated region
    $region22: #{tpu_custom_call.1} parent=1 // pred_check
      _
    $region23: #{tpu_custom_call.1} parent=1 // pred_check_branch
      %63 = sbr.rel (0) target = $region25
    $region24: #{tpu_custom_call.1} parent=1 // pred_region
      %64 = dma.done [#allocation4], 256
    $region25: #{tpu_custom_call.1} parent=1 // pred_fallthru
      _
    // Predicated region
    $region26: #{tpu_custom_call.1} parent=1 // pred_check
      _
    $region27: #{tpu_custom_call.1} parent=1 // pred_check_branch
      %66 = sbr.rel (0) target = $region29
    $region28: #{tpu_custom_call.1} parent=1 // pred_region
      %67 = dma.done [#allocation7], 32
    $region29: #{tpu_custom_call.1} parent=1 // pred_fallthru
      _
    // Predicated region
    $region30: #{tpu_custom_call.1} parent=1 // pred_check
      _
    $region31: #{tpu_custom_call.1} parent=1 // pred_check_branch
      %69 = sbr.rel (0) target = $region33
    $region32: #{tpu_custom_call.1} parent=1 // pred_region
      %70 = dma.done [#allocation7], 1024
    $region33: #{tpu_custom_call.1} parent=1 // pred_fallthru
      _
    // Predicated region
    $region34: #{tpu_custom_call.1} parent=1 // pred_check
      _
    $region35: #{tpu_custom_call.1} parent=1 // pred_check_branch
      %72 = sbr.rel (0) target = $region37
    $region36: #{tpu_custom_call.1} parent=1 // pred_region
      %73 = dma.done [#allocation10], 1024
    $region37: #{tpu_custom_call.1} parent=1 // pred_fallthru
      _
    %p75 = scmp.eq.s32.totalorder 0, 0
    // Predicated region
    $region38: #{tpu_custom_call.1} parent=1 // pred_check
      %p76 = pneg %p75
    $region39: #{tpu_custom_call.1} parent=1 // pred_check_branch
      %78 = sbr.rel (%p76) target = $region41
    $region40: #{tpu_custom_call.1} parent=1 // pred_region
      %v79 = vld [vmem:[#allocation6] sm:$0x3]
      %80 = vst [vmem:[#allocation2] sm:$0x3] %v79
    $region41: #{tpu_custom_call.1} parent=1 // pred_fallthru
      _
    %v81 = vld [vmem:[#allocation8] sm:$0xf]
    %v82 = vld [vmem:[#allocation8 + $0x4] sm:$0xf]
    %v83 = vld [vmem:[#allocation8 + $0x8] sm:$0xf]
    %v84 = vld [vmem:[#allocation8 + $0xc] sm:$0xf]
    %v85 = vld [vmem:[#allocation8 + $0x10] sm:$0xf]
    %v86 = vld [vmem:[#allocation8 + $0x14] sm:$0xf]
    %v87 = vld [vmem:[#allocation8 + $0x18] sm:$0xf]
    %v88 = vld [vmem:[#allocation8 + $0x1c] sm:$0xf]
    %v89 = vld [vmem:[#allocation8 + $0x20] sm:$0xf]
    %v90 = vld [vmem:[#allocation8 + $0x24] sm:$0xf]
    %v91 = vld [vmem:[#allocation8 + $0x28] sm:$0xf]
    %v92 = vld [vmem:[#allocation8 + $0x2c] sm:$0xf]
    %v93 = vld [vmem:[#allocation8 + $0x30] sm:$0xf]
    %v94 = vld [vmem:[#allocation8 + $0x34] sm:$0xf]
    %v95 = vld [vmem:[#allocation8 + $0x38] sm:$0xf]
    %v96 = vld [vmem:[#allocation8 + $0x3c] sm:$0xf]
    %v97 = vld [vmem:[#allocation9] sm:$0xf]
    %v98 = vld [vmem:[#allocation9 + $0x4] sm:$0xf]
    %v99 = vld [vmem:[#allocation9 + $0x8] sm:$0xf]
    %v100 = vld [vmem:[#allocation9 + $0xc] sm:$0xf]
    %v101 = vld [vmem:[#allocation9 + $0x10] sm:$0xf]
    %v102 = vld [vmem:[#allocation9 + $0x14] sm:$0xf]
    %v103 = vld [vmem:[#allocation9 + $0x18] sm:$0xf]
    %v104 = vld [vmem:[#allocation9 + $0x1c] sm:$0xf]
    %v105 = vld [vmem:[#allocation9 + $0x20] sm:$0xf]
    %v106 = vld [vmem:[#allocation9 + $0x24] sm:$0xf]
    %v107 = vld [vmem:[#allocation9 + $0x28] sm:$0xf]
    %v108 = vld [vmem:[#allocation9 + $0x2c] sm:$0xf]
    %v109 = vld [vmem:[#allocation9 + $0x30] sm:$0xf]
    %v110 = vld [vmem:[#allocation9 + $0x34] sm:$0xf]
    %v111 = vld [vmem:[#allocation9 + $0x38] sm:$0xf]
    %v112 = vld [vmem:[#allocation9 + $0x3c] sm:$0xf]
    %v113 = vld [vmem:[%s4] sm:$0x1]
    %v115 = vlaneseq
    %v116 = vshrl.u32 %v115, 7
    %v117 = vsub.s32 0, %v116
    %v118 = vrot.slane %v113, %v117
    %v120 = vld [vmem:[#allocation2] sm:$0x3]
    %v121 = vld [vmem:[#allocation3] sm:$0x1]
    %v122 = vld [vmem:[#allocation3 + $0x8] sm:$0x1]
    %v123 = vpack.c.bf16 %v121, %v121
    %v124 = vpack.c.bf16 %v122, %v122
    %v127 = vunpack.c.l.b16 %v123
    %v128 = vunpack.c.l.b16 %v124
    %v129 = vrot.slane %v128, 7
    %vm130 = vcmask 1041409
    %v131 = vsel %vm130, %v129, %v127
    %v132 = vpack.c.b16 %v131, %v131
    %v150 = vunpack.c.l.b16 %v81
    %v151 = vunpack.c.l.b16 %v82
    %v152 = vunpack.c.l.b16 %v83
    %v153 = vunpack.c.l.b16 %v84
    %v154 = vunpack.c.l.b16 %v85
    %v155 = vunpack.c.l.b16 %v86
    %v156 = vunpack.c.l.b16 %v87
    %v157 = vunpack.c.l.b16 %v88
    %v158 = vunpack.c.l.b16 %v89
    %v159 = vunpack.c.l.b16 %v90
    %v160 = vunpack.c.l.b16 %v91
    %v161 = vunpack.c.l.b16 %v92
    %v162 = vunpack.c.l.b16 %v93
    %v163 = vunpack.c.l.b16 %v94
    %v164 = vunpack.c.l.b16 %v95
    %v165 = vunpack.c.l.b16 %v96
    %v166 = vpack.c.b16 %v151, %v150
    %v167 = vpack.c.b16 %v153, %v152
    %v168 = vpack.c.b16 %v155, %v154
    %v169 = vpack.c.b16 %v157, %v156
    %v170 = vpack.c.b16 %v159, %v158
    %v171 = vpack.c.b16 %v161, %v160
    %v172 = vpack.c.b16 %v163, %v162
    %v173 = vpack.c.b16 %v165, %v164
    %182 = vmatprep.subr.bf16.mxu0 0
    %183 = vmatpush1.bf16.msra.mxu0 %v173
    %184 = vmatprep.subr.bf16.mxu0 0
    %185 = vmatpush1.bf16.msra.mxu0 %v172
    %186 = vmatprep.subr.bf16.mxu0 0
    %187 = vmatpush1.bf16.msra.mxu0 %v171
    %188 = vmatprep.subr.bf16.mxu0 0
    %189 = vmatpush1.bf16.msra.mxu0 %v170
    %190 = vmatprep.subr.bf16.mxu0 0
    %191 = vmatpush1.bf16.msra.mxu0 %v169
    %192 = vmatprep.subr.bf16.mxu0 0
    %193 = vmatpush1.bf16.msra.mxu0 %v168
    %194 = vmatprep.subr.bf16.mxu0 0
    %195 = vmatpush1.bf16.msra.mxu0 %v167
    %196 = vmatprep.subr.bf16.mxu0 0
    %197 = vmatpush1.bf16.msra.mxu0 %v166
    %198 = vmatprep.subr.bf16.mxu0 0
    %199 = vmatpush2.bf16.msra.mxu0 0
    %200 = vmatprep.subr.bf16.mxu0 0
    %201 = vmatpush2.bf16.msra.mxu0 0
    %202 = vmatprep.subr.bf16.mxu0 0
    %203 = vmatpush2.bf16.msra.mxu0 0
    %204 = vmatprep.subr.bf16.mxu0 0
    %205 = vmatpush2.bf16.msra.mxu0 0
    %206 = vmatprep.subr.bf16.mxu0 0
    %207 = vmatpush2.bf16.msra.mxu0 0
    %208 = vmatprep.subr.bf16.mxu0 0
    %209 = vmatpush2.bf16.msra.mxu0 0
    %210 = vmatprep.subr.bf16.mxu0 0
    %211 = vmatpush2.bf16.msra.mxu0 0
    %212 = vmatprep.subr.bf16.mxu0 0
    %213 = vmatpush2.bf16.msra.mxu0 0
    %214 = vmatprep.mubr.bf16.mxu0 0
    %215 = vmatmul.mubr.bf16.gmra.mxu0 %v132
    %v216 = vpop.f32.mrf.mxu0
    %v217 = vadd.f32 %v118, %v216
    %v218 = vpop.f32.mrf.mxu0
    %v219 = vpop.f32.mrf.mxu0
    %v220 = vpop.f32.mrf.mxu0
    %221 = vdwg.mxu0
    %v222 = vpack.c.bf16 %v120, %v120
    %v239 = vunpack.c.l.b16 %v97
    %v240 = vunpack.c.l.b16 %v98
    %v241 = vunpack.c.l.b16 %v99
    %v242 = vunpack.c.l.b16 %v100
    %v243 = vunpack.c.l.b16 %v101
    %v244 = vunpack.c.l.b16 %v102
    %v245 = vunpack.c.l.b16 %v103
    %v246 = vunpack.c.l.b16 %v104
    %v247 = vunpack.c.l.b16 %v105
    %v248 = vunpack.c.l.b16 %v106
    %v249 = vunpack.c.l.b16 %v107
    %v250 = vunpack.c.l.b16 %v108
    %v251 = vunpack.c.l.b16 %v109
    %v252 = vunpack.c.l.b16 %v110
    %v253 = vunpack.c.l.b16 %v111
    %v254 = vunpack.c.l.b16 %v112
    %v255 = vpack.c.b16 %v240, %v239
    %v256 = vpack.c.b16 %v242, %v241
    %v257 = vpack.c.b16 %v244, %v243
    %v258 = vpack.c.b16 %v246, %v245
    %v259 = vpack.c.b16 %v248, %v247
    %v260 = vpack.c.b16 %v250, %v249
    %v261 = vpack.c.b16 %v252, %v251
    %v262 = vpack.c.b16 %v254, %v253
    %271 = vmatprep.subr.bf16.mxu0 0
    %272 = vmatpush1.bf16.msra.mxu0 %v262
    %273 = vmatprep.subr.bf16.mxu0 0
    %274 = vmatpush1.bf16.msra.mxu0 %v261
    %275 = vmatprep.subr.bf16.mxu0 0
    %276 = vmatpush1.bf16.msra.mxu0 %v260
    %277 = vmatprep.subr.bf16.mxu0 0
    %278 = vmatpush1.bf16.msra.mxu0 %v259
    %279 = vmatprep.subr.bf16.mxu0 0
    %280 = vmatpush1.bf16.msra.mxu0 %v258
    %281 = vmatprep.subr.bf16.mxu0 0
    %282 = vmatpush1.bf16.msra.mxu0 %v257
    %283 = vmatprep.subr.bf16.mxu0 0
    %284 = vmatpush1.bf16.msra.mxu0 %v256
    %285 = vmatprep.subr.bf16.mxu0 0
    %286 = vmatpush1.bf16.msra.mxu0 %v255
    %287 = vmatprep.subr.bf16.mxu0 0
    %288 = vmatpush2.bf16.msra.mxu0 0
    %289 = vmatprep.subr.bf16.mxu0 0
    %290 = vmatpush2.bf16.msra.mxu0 0
    %291 = vmatprep.subr.bf16.mxu0 0
    %292 = vmatpush2.bf16.msra.mxu0 0
    %293 = vmatprep.subr.bf16.mxu0 0
    %294 = vmatpush2.bf16.msra.mxu0 0
    %295 = vmatprep.subr.bf16.mxu0 0
    %296 = vmatpush2.bf16.msra.mxu0 0
    %297 = vmatprep.subr.bf16.mxu0 0
    %298 = vmatpush2.bf16.msra.mxu0 0
    %299 = vmatprep.subr.bf16.mxu0 0
    %300 = vmatpush2.bf16.msra.mxu0 0
    %301 = vmatprep.subr.bf16.mxu0 0
    %302 = vmatpush2.bf16.msra.mxu0 0
    %303 = vmatprep.mubr.bf16.mxu0 0
    %304 = vmatmul.mubr.bf16.gmra.mxu0 %v222
    %v305 = vpop.f32.mrf.mxu0
    %v306 = vadd.f32 0.0, %v305
    %v307 = vpop.f32.mrf.mxu0
    %v308 = vpop.f32.mrf.mxu0
    %v309 = vpop.f32.mrf.mxu0
    %310 = vdwg.mxu0
    %v311 = vadd.f32 %v217, %v306
    %v312 = vtanh.pop %v311
    %v315 = vunpack.c.l.s4 1966171168
    %v316 = vunpack.c.0.s8 %v315
    %v317 = vlaneseq
    %v318 = vshrl.u32 %v317, 7
    %v319 = vsub.s32 %v316, %v318
    %v320 = vrot.slane %v312, %v319
    %v321 = vcombine.high %v320, %v320
    %v323 = vunpack.c.l.s4 1966171168
    %v324 = vunpack.c.0.s8 %v323
    %v325 = vlaneseq
    %v326 = vshrl.u32 %v325, 7
    %v327 = vsub.s32 %v324, %v326
    %v328 = vrot.slane %v320, %v327
    %v330 = vunpack.c.l.s4 1966171168
    %v331 = vunpack.c.0.s8 %v330
    %v332 = vlaneseq
    %v333 = vshrl.u32 %v332, 7
    %v334 = vsub.s32 %v331, %v333
    %v335 = vrot.slane %v321, %v334
    %338 = vst [vmem:[#allocation11] sm:$0x1] %v328
    %339 = vst [vmem:[#allocation11 + $0x8] sm:$0x1] %v335
    %v340 = vld [vmem:[#allocation3 + $0x1] sm:$0x1]
    %v341 = vld [vmem:[#allocation3 + $0x9] sm:$0x1]
    %v342 = vpack.c.bf16 %v340, %v340
    %v343 = vpack.c.bf16 %v341, %v341
    %v346 = vunpack.c.l.b16 %v342
    %v347 = vunpack.c.l.b16 %v343
    %v348 = vrot.slane %v347, 7
    %v349 = vsel %vm130, %v348, %v346
    %v350 = vpack.c.b16 %v349, %v349
    %352 = vmatprep.subr.bf16.mxu0 0
    %353 = vmatpush1.bf16.msra.mxu0 %v173
    %354 = vmatprep.subr.bf16.mxu0 0
    %355 = vmatpush1.bf16.msra.mxu0 %v172
    %356 = vmatprep.subr.bf16.mxu0 0
    %357 = vmatpush1.bf16.msra.mxu0 %v171
    %358 = vmatprep.subr.bf16.mxu0 0
    %359 = vmatpush1.bf16.msra.mxu0 %v170
    %360 = vmatprep.subr.bf16.mxu0 0
    %361 = vmatpush1.bf16.msra.mxu0 %v169
    %362 = vmatprep.subr.bf16.mxu0 0
    %363 = vmatpush1.bf16.msra.mxu0 %v168
    %364 = vmatprep.subr.bf16.mxu0 0
    %365 = vmatpush1.bf16.msra.mxu0 %v167
    %366 = vmatprep.subr.bf16.mxu0 0
    %367 = vmatpush1.bf16.msra.mxu0 %v166
    %368 = vmatprep.subr.bf16.mxu0 0
    %369 = vmatpush2.bf16.msra.mxu0 0
    %370 = vmatprep.subr.bf16.mxu0 0
    %371 = vmatpush2.bf16.msra.mxu0 0
    %372 = vmatprep.subr.bf16.mxu0 0
    %373 = vmatpush2.bf16.msra.mxu0 0
    %374 = vmatprep.subr.bf16.mxu0 0
    %375 = vmatpush2.bf16.msra.mxu0 0
    %376 = vmatprep.subr.bf16.mxu0 0
    %377 = vmatpush2.bf16.msra.mxu0 0
    %378 = vmatprep.subr.bf16.mxu0 0
    %379 = vmatpush2.bf16.msra.mxu0 0
    %380 = vmatprep.subr.bf16.mxu0 0
    %381 = vmatpush2.bf16.msra.mxu0 0
    %382 = vmatprep.subr.bf16.mxu0 0
    %383 = vmatpush2.bf16.msra.mxu0 0
    %384 = vmatprep.mubr.bf16.mxu0 0
    %385 = vmatmul.mubr.bf16.gmra.mxu0 %v350
    %v386 = vpop.f32.mrf.mxu0
    %v387 = vadd.f32 %v118, %v386
    %v388 = vpop.f32.mrf.mxu0
    %v389 = vpop.f32.mrf.mxu0
    %v390 = vpop.f32.mrf.mxu0
    %391 = vdwg.mxu0
    %v392 = vpack.c.bf16 %v312, %v312
    %393 = vmatprep.subr.bf16.mxu0 0
    %394 = vmatpush1.bf16.msra.mxu0 %v262
    %395 = vmatprep.subr.bf16.mxu0 0
    %396 = vmatpush1.bf16.msra.mxu0 %v261
    %397 = vmatprep.subr.bf16.mxu0 0
    %398 = vmatpush1.bf16.msra.mxu0 %v260
    %399 = vmatprep.subr.bf16.mxu0 0
    %400 = vmatpush1.bf16.msra.mxu0 %v259
    %401 = vmatprep.subr.bf16.mxu0 0
    %402 = vmatpush1.bf16.msra.mxu0 %v258
    %403 = vmatprep.subr.bf16.mxu0 0
    %404 = vmatpush1.bf16.msra.mxu0 %v257
    %405 = vmatprep.subr.bf16.mxu0 0
    %406 = vmatpush1.bf16.msra.mxu0 %v256
    %407 = vmatprep.subr.bf16.mxu0 0
    %408 = vmatpush1.bf16.msra.mxu0 %v255
    %409 = vmatprep.subr.bf16.mxu0 0
    %410 = vmatpush2.bf16.msra.mxu0 0
    %411 = vmatprep.subr.bf16.mxu0 0
    %412 = vmatpush2.bf16.msra.mxu0 0
    %413 = vmatprep.subr.bf16.mxu0 0
    %414 = vmatpush2.bf16.msra.mxu0 0
    %415 = vmatprep.subr.bf16.mxu0 0
    %416 = vmatpush2.bf16.msra.mxu0 0
    %417 = vmatprep.subr.bf16.mxu0 0
    %418 = vmatpush2.bf16.msra.mxu0 0
    %419 = vmatprep.subr.bf16.mxu0 0
    %420 = vmatpush2.bf16.msra.mxu0 0
    %421 = vmatprep.subr.bf16.mxu0 0
    %422 = vmatpush2.bf16.msra.mxu0 0
    %423 = vmatprep.subr.bf16.mxu0 0
    %424 = vmatpush2.bf16.msra.mxu0 0
    %425 = vmatprep.mubr.bf16.mxu0 0
    %426 = vmatmul.mubr.bf16.gmra.mxu0 %v392
    %v427 = vpop.f32.mrf.mxu0
    %v428 = vadd.f32 0.0, %v427
    %v429 = vpop.f32.mrf.mxu0
    %v430 = vpop.f32.mrf.mxu0
    %v431 = vpop.f32.mrf.mxu0
    %432 = vdwg.mxu0
    %v433 = vadd.f32 %v387, %v428
    %v434 = vtanh.pop %v433
    %v437 = vunpack.c.l.s4 1966171168
    %v438 = vunpack.c.0.s8 %v437
    %v439 = vlaneseq
    %v440 = vshrl.u32 %v439, 7
    %v441 = vsub.s32 %v438, %v440
    %v442 = vrot.slane %v434, %v441
    %v443 = vcombine.high %v442, %v442
    %v445 = vunpack.c.l.s4 1966171168
    %v446 = vunpack.c.0.s8 %v445
    %v447 = vlaneseq
    %v448 = vshrl.u32 %v447, 7
    %v449 = vsub.s32 %v446, %v448
    %v450 = vrot.slane %v442, %v449
    %v452 = vunpack.c.l.s4 1966171168
    %v453 = vunpack.c.0.s8 %v452
    %v454 = vlaneseq
    %v455 = vshrl.u32 %v454, 7
    %v456 = vsub.s32 %v453, %v455
    %v457 = vrot.slane %v443, %v456
    %460 = vst [vmem:[#allocation11 + $0x1] sm:$0x1] %v450
    %461 = vst [vmem:[#allocation11 + $0x9] sm:$0x1] %v457
    %v462 = vld [vmem:[#allocation3 + $0x2] sm:$0x1]
    %v463 = vld [vmem:[#allocation3 + $0xa] sm:$0x1]
    %v464 = vpack.c.bf16 %v462, %v462
    %v465 = vpack.c.bf16 %v463, %v463
    %v468 = vunpack.c.l.b16 %v464
    %v469 = vunpack.c.l.b16 %v465
    %v470 = vrot.slane %v469, 7
    %v471 = vsel %vm130, %v470, %v468
    %v472 = vpack.c.b16 %v471, %v471
    %474 = vmatprep.subr.bf16.mxu0 0
    %475 = vmatpush1.bf16.msra.mxu0 %v173
    %476 = vmatprep.subr.bf16.mxu0 0
    %477 = vmatpush1.bf16.msra.mxu0 %v172
    %478 = vmatprep.subr.bf16.mxu0 0
    %479 = vmatpush1.bf16.msra.mxu0 %v171
    %480 = vmatprep.subr.bf16.mxu0 0
    %481 = vmatpush1.bf16.msra.mxu0 %v170
    %482 = vmatprep.subr.bf16.mxu0 0
    %483 = vmatpush1.bf16.msra.mxu0 %v169
    %484 = vmatprep.subr.bf16.mxu0 0
    %485 = vmatpush1.bf16.msra.mxu0 %v168
    %486 = vmatprep.subr.bf16.mxu0 0
    %487 = vmatpush1.bf16.msra.mxu0 %v167
    %488 = vmatprep.subr.bf16.mxu0 0
    %489 = vmatpush1.bf16.msra.mxu0 %v166
    %490 = vmatprep.subr.bf16.mxu0 0
    %491 = vmatpush2.bf16.msra.mxu0 0
    %492 = vmatprep.subr.bf16.mxu0 0
    %493 = vmatpush2.bf16.msra.mxu0 0
    %494 = vmatprep.subr.bf16.mxu0 0
    %495 = vmatpush2.bf16.msra.mxu0 0
    %496 = vmatprep.subr.bf16.mxu0 0
    %497 = vmatpush2.bf16.msra.mxu0 0
    %498 = vmatprep.subr.bf16.mxu0 0
    %499 = vmatpush2.bf16.msra.mxu0 0
    %500 = vmatprep.subr.bf16.mxu0 0
    %501 = vmatpush2.bf16.msra.mxu0 0
    %502 = vmatprep.subr.bf16.mxu0 0
    %503 = vmatpush2.bf16.msra.mxu0 0
    %504 = vmatprep.subr.bf16.mxu0 0
    %505 = vmatpush2.bf16.msra.mxu0 0
    %506 = vmatprep.mubr.bf16.mxu0 0
    %507 = vmatmul.mubr.bf16.gmra.mxu0 %v472
    %v508 = vpop.f32.mrf.mxu0
    %v509 = vadd.f32 %v118, %v508
    %v510 = vpop.f32.mrf.mxu0
    %v511 = vpop.f32.mrf.mxu0
    %v512 = vpop.f32.mrf.mxu0
    %513 = vdwg.mxu0
    %v514 = vpack.c.bf16 %v434, %v434
    %515 = vmatprep.subr.bf16.mxu0 0
    %516 = vmatpush1.bf16.msra.mxu0 %v262
    %517 = vmatprep.subr.bf16.mxu0 0
    %518 = vmatpush1.bf16.msra.mxu0 %v261
    %519 = vmatprep.subr.bf16.mxu0 0
    %520 = vmatpush1.bf16.msra.mxu0 %v260
    %521 = vmatprep.subr.bf16.mxu0 0
    %522 = vmatpush1.bf16.msra.mxu0 %v259
    %523 = vmatprep.subr.bf16.mxu0 0
    %524 = vmatpush1.bf16.msra.mxu0 %v258
    %525 = vmatprep.subr.bf16.mxu0 0
    %526 = vmatpush1.bf16.msra.mxu0 %v257
    %527 = vmatprep.subr.bf16.mxu0 0
    %528 = vmatpush1.bf16.msra.mxu0 %v256
    %529 = vmatprep.subr.bf16.mxu0 0
    %530 = vmatpush1.bf16.msra.mxu0 %v255
    %531 = vmatprep.subr.bf16.mxu0 0
    %532 = vmatpush2.bf16.msra.mxu0 0
    %533 = vmatprep.subr.bf16.mxu0 0
    %534 = vmatpush2.bf16.msra.mxu0 0
    %535 = vmatprep.subr.bf16.mxu0 0
    %536 = vmatpush2.bf16.msra.mxu0 0
    %537 = vmatprep.subr.bf16.mxu0 0
    %538 = vmatpush2.bf16.msra.mxu0 0
    %539 = vmatprep.subr.bf16.mxu0 0
    %540 = vmatpush2.bf16.msra.mxu0 0
    %541 = vmatprep.subr.bf16.mxu0 0
    %542 = vmatpush2.bf16.msra.mxu0 0
    %543 = vmatprep.subr.bf16.mxu0 0
    %544 = vmatpush2.bf16.msra.mxu0 0
    %545 = vmatprep.subr.bf16.mxu0 0
    %546 = vmatpush2.bf16.msra.mxu0 0
    %547 = vmatprep.mubr.bf16.mxu0 0
    %548 = vmatmul.mubr.bf16.gmra.mxu0 %v514
    %v549 = vpop.f32.mrf.mxu0
    %v550 = vadd.f32 0.0, %v549
    %v551 = vpop.f32.mrf.mxu0
    %v552 = vpop.f32.mrf.mxu0
    %v553 = vpop.f32.mrf.mxu0
    %554 = vdwg.mxu0
    %v555 = vadd.f32 %v509, %v550
    %v556 = vtanh.pop %v555
    %v559 = vunpack.c.l.s4 1966171168
    %v560 = vunpack.c.0.s8 %v559
    %v561 = vlaneseq
    %v562 = vshrl.u32 %v561, 7
    %v563 = vsub.s32 %v560, %v562
    %v564 = vrot.slane %v556, %v563
    %v565 = vcombine.high %v564, %v564
    %v567 = vunpack.c.l.s4 1966171168
    %v568 = vunpack.c.0.s8 %v567
    %v569 = vlaneseq
    %v570 = vshrl.u32 %v569, 7
    %v571 = vsub.s32 %v568, %v570
    %v572 = vrot.slane %v564, %v571
    %v574 = vunpack.c.l.s4 1966171168
    %v575 = vunpack.c.0.s8 %v574
    %v576 = vlaneseq
    %v577 = vshrl.u32 %v576, 7
    %v578 = vsub.s32 %v575, %v577
    %v579 = vrot.slane %v565, %v578
    %582 = vst [vmem:[#allocation11 + $0x2] sm:$0x1] %v572
    %583 = vst [vmem:[#allocation11 + $0xa] sm:$0x1] %v579
    %v584 = vld [vmem:[#allocation3 + $0x3] sm:$0x1]
    %v585 = vld [vmem:[#allocation3 + $0xb] sm:$0x1]
    %v586 = vpack.c.bf16 %v584, %v584
    %v587 = vpack.c.bf16 %v585, %v585
    %v590 = vunpack.c.l.b16 %v586
    %v591 = vunpack.c.l.b16 %v587
    %v592 = vrot.slane %v591, 7
    %v593 = vsel %vm130, %v592, %v590
    %v594 = vpack.c.b16 %v593, %v593
    %596 = vmatprep.subr.bf16.mxu0 0
    %597 = vmatpush1.bf16.msra.mxu0 %v173
    %598 = vmatprep.subr.bf16.mxu0 0
    %599 = vmatpush1.bf16.msra.mxu0 %v172
    %600 = vmatprep.subr.bf16.mxu0 0
    %601 = vmatpush1.bf16.msra.mxu0 %v171
    %602 = vmatprep.subr.bf16.mxu0 0
    %603 = vmatpush1.bf16.msra.mxu0 %v170
    %604 = vmatprep.subr.bf16.mxu0 0
    %605 = vmatpush1.bf16.msra.mxu0 %v169
    %606 = vmatprep.subr.bf16.mxu0 0
    %607 = vmatpush1.bf16.msra.mxu0 %v168
    %608 = vmatprep.subr.bf16.mxu0 0
    %609 = vmatpush1.bf16.msra.mxu0 %v167
    %610 = vmatprep.subr.bf16.mxu0 0
    %611 = vmatpush1.bf16.msra.mxu0 %v166
    %612 = vmatprep.subr.bf16.mxu0 0
    %613 = vmatpush2.bf16.msra.mxu0 0
    %614 = vmatprep.subr.bf16.mxu0 0
    %615 = vmatpush2.bf16.msra.mxu0 0
    %616 = vmatprep.subr.bf16.mxu0 0
    %617 = vmatpush2.bf16.msra.mxu0 0
    %618 = vmatprep.subr.bf16.mxu0 0
    %619 = vmatpush2.bf16.msra.mxu0 0
    %620 = vmatprep.subr.bf16.mxu0 0
    %621 = vmatpush2.bf16.msra.mxu0 0
    %622 = vmatprep.subr.bf16.mxu0 0
    %623 = vmatpush2.bf16.msra.mxu0 0
    %624 = vmatprep.subr.bf16.mxu0 0
    %625 = vmatpush2.bf16.msra.mxu0 0
    %626 = vmatprep.subr.bf16.mxu0 0
    %627 = vmatpush2.bf16.msra.mxu0 0
    %628 = vmatprep.mubr.bf16.mxu0 0
    %629 = vmatmul.mubr.bf16.gmra.mxu0 %v594
    %v630 = vpop.f32.mrf.mxu0
    %v631 = vadd.f32 %v118, %v630
    %v632 = vpop.f32.mrf.mxu0
    %v633 = vpop.f32.mrf.mxu0
    %v634 = vpop.f32.mrf.mxu0
    %635 = vdwg.mxu0
    %v636 = vpack.c.bf16 %v556, %v556
    %637 = vmatprep.subr.bf16.mxu0 0
    %638 = vmatpush1.bf16.msra.mxu0 %v262
    %639 = vmatprep.subr.bf16.mxu0 0
    %640 = vmatpush1.bf16.msra.mxu0 %v261
    %641 = vmatprep.subr.bf16.mxu0 0
    %642 = vmatpush1.bf16.msra.mxu0 %v260
    %643 = vmatprep.subr.bf16.mxu0 0
    %644 = vmatpush1.bf16.msra.mxu0 %v259
    %645 = vmatprep.subr.bf16.mxu0 0
    %646 = vmatpush1.bf16.msra.mxu0 %v258
    %647 = vmatprep.subr.bf16.mxu0 0
    %648 = vmatpush1.bf16.msra.mxu0 %v257
    %649 = vmatprep.subr.bf16.mxu0 0
    %650 = vmatpush1.bf16.msra.mxu0 %v256
    %651 = vmatprep.subr.bf16.mxu0 0
    %652 = vmatpush1.bf16.msra.mxu0 %v255
    %653 = vmatprep.subr.bf16.mxu0 0
    %654 = vmatpush2.bf16.msra.mxu0 0
    %655 = vmatprep.subr.bf16.mxu0 0
    %656 = vmatpush2.bf16.msra.mxu0 0
    %657 = vmatprep.subr.bf16.mxu0 0
    %658 = vmatpush2.bf16.msra.mxu0 0
    %659 = vmatprep.subr.bf16.mxu0 0
    %660 = vmatpush2.bf16.msra.mxu0 0
    %661 = vmatprep.subr.bf16.mxu0 0
    %662 = vmatpush2.bf16.msra.mxu0 0
    %663 = vmatprep.subr.bf16.mxu0 0
    %664 = vmatpush2.bf16.msra.mxu0 0
    %665 = vmatprep.subr.bf16.mxu0 0
    %666 = vmatpush2.bf16.msra.mxu0 0
    %667 = vmatprep.subr.bf16.mxu0 0
    %668 = vmatpush2.bf16.msra.mxu0 0
    %669 = vmatprep.mubr.bf16.mxu0 0
    %670 = vmatmul.mubr.bf16.gmra.mxu0 %v636
    %v671 = vpop.f32.mrf.mxu0
    %v672 = vadd.f32 0.0, %v671
    %v673 = vpop.f32.mrf.mxu0
    %v674 = vpop.f32.mrf.mxu0
    %v675 = vpop.f32.mrf.mxu0
    %676 = vdwg.mxu0
    %v677 = vadd.f32 %v631, %v672
    %v678 = vtanh.pop %v677
    %v681 = vunpack.c.l.s4 1966171168
    %v682 = vunpack.c.0.s8 %v681
    %v683 = vlaneseq
    %v684 = vshrl.u32 %v683, 7
    %v685 = vsub.s32 %v682, %v684
    %v686 = vrot.slane %v678, %v685
    %v687 = vcombine.high %v686, %v686
    %v689 = vunpack.c.l.s4 1966171168
    %v690 = vunpack.c.0.s8 %v689
    %v691 = vlaneseq
    %v692 = vshrl.u32 %v691, 7
    %v693 = vsub.s32 %v690, %v692
    %v694 = vrot.slane %v686, %v693
    %v696 = vunpack.c.l.s4 1966171168
    %v697 = vunpack.c.0.s8 %v696
    %v698 = vlaneseq
    %v699 = vshrl.u32 %v698, 7
    %v700 = vsub.s32 %v697, %v699
    %v701 = vrot.slane %v687, %v700
    %704 = vst [vmem:[#allocation11 + $0x3] sm:$0x1] %v694
    %705 = vst [vmem:[#allocation11 + $0xb] sm:$0x1] %v701
    %v706 = vld [vmem:[#allocation3 + $0x4] sm:$0x1]
    %v707 = vld [vmem:[#allocation3 + $0xc] sm:$0x1]
    %v708 = vpack.c.bf16 %v706, %v706
    %v709 = vpack.c.bf16 %v707, %v707
    %v712 = vunpack.c.l.b16 %v708
    %v713 = vunpack.c.l.b16 %v709
    %v714 = vrot.slane %v713, 7
    %v715 = vsel %vm130, %v714, %v712
    %v716 = vpack.c.b16 %v715, %v715
    %718 = vmatprep.subr.bf16.mxu0 0
    %719 = vmatpush1.bf16.msra.mxu0 %v173
    %720 = vmatprep.subr.bf16.mxu0 0
    %721 = vmatpush1.bf16.msra.mxu0 %v172
    %722 = vmatprep.subr.bf16.mxu0 0
    %723 = vmatpush1.bf16.msra.mxu0 %v171
    %724 = vmatprep.subr.bf16.mxu0 0
    %725 = vmatpush1.bf16.msra.mxu0 %v170
    %726 = vmatprep.subr.bf16.mxu0 0
    %727 = vmatpush1.bf16.msra.mxu0 %v169
    %728 = vmatprep.subr.bf16.mxu0 0
    %729 = vmatpush1.bf16.msra.mxu0 %v168
    %730 = vmatprep.subr.bf16.mxu0 0
    %731 = vmatpush1.bf16.msra.mxu0 %v167
    %732 = vmatprep.subr.bf16.mxu0 0
    %733 = vmatpush1.bf16.msra.mxu0 %v166
    %734 = vmatprep.subr.bf16.mxu0 0
    %735 = vmatpush2.bf16.msra.mxu0 0
    %736 = vmatprep.subr.bf16.mxu0 0
    %737 = vmatpush2.bf16.msra.mxu0 0
    %738 = vmatprep.subr.bf16.mxu0 0
    %739 = vmatpush2.bf16.msra.mxu0 0
    %740 = vmatprep.subr.bf16.mxu0 0
    %741 = vmatpush2.bf16.msra.mxu0 0
    %742 = vmatprep.subr.bf16.mxu0 0
    %743 = vmatpush2.bf16.msra.mxu0 0
    %744 = vmatprep.subr.bf16.mxu0 0
    %745 = vmatpush2.bf16.msra.mxu0 0
    %746 = vmatprep.subr.bf16.mxu0 0
    %747 = vmatpush2.bf16.msra.mxu0 0
    %748 = vmatprep.subr.bf16.mxu0 0
    %749 = vmatpush2.bf16.msra.mxu0 0
    %750 = vmatprep.mubr.bf16.mxu0 0
    %751 = vmatmul.mubr.bf16.gmra.mxu0 %v716
    %v752 = vpop.f32.mrf.mxu0
    %v753 = vadd.f32 %v118, %v752
    %v754 = vpop.f32.mrf.mxu0
    %v755 = vpop.f32.mrf.mxu0
    %v756 = vpop.f32.mrf.mxu0
    %757 = vdwg.mxu0
    %v758 = vpack.c.bf16 %v678, %v678
    %759 = vmatprep.subr.bf16.mxu0 0
    %760 = vmatpush1.bf16.msra.mxu0 %v262
    %761 = vmatprep.subr.bf16.mxu0 0
    %762 = vmatpush1.bf16.msra.mxu0 %v261
    %763 = vmatprep.subr.bf16.mxu0 0
    %764 = vmatpush1.bf16.msra.mxu0 %v260
    %765 = vmatprep.subr.bf16.mxu0 0
    %766 = vmatpush1.bf16.msra.mxu0 %v259
    %767 = vmatprep.subr.bf16.mxu0 0
    %768 = vmatpush1.bf16.msra.mxu0 %v258
    %769 = vmatprep.subr.bf16.mxu0 0
    %770 = vmatpush1.bf16.msra.mxu0 %v257
    %771 = vmatprep.subr.bf16.mxu0 0
    %772 = vmatpush1.bf16.msra.mxu0 %v256
    %773 = vmatprep.subr.bf16.mxu0 0
    %774 = vmatpush1.bf16.msra.mxu0 %v255
    %775 = vmatprep.subr.bf16.mxu0 0
    %776 = vmatpush2.bf16.msra.mxu0 0
    %777 = vmatprep.subr.bf16.mxu0 0
    %778 = vmatpush2.bf16.msra.mxu0 0
    %779 = vmatprep.subr.bf16.mxu0 0
    %780 = vmatpush2.bf16.msra.mxu0 0
    %781 = vmatprep.subr.bf16.mxu0 0
    %782 = vmatpush2.bf16.msra.mxu0 0
    %783 = vmatprep.subr.bf16.mxu0 0
    %784 = vmatpush2.bf16.msra.mxu0 0
    %785 = vmatprep.subr.bf16.mxu0 0
    %786 = vmatpush2.bf16.msra.mxu0 0
    %787 = vmatprep.subr.bf16.mxu0 0
    %788 = vmatpush2.bf16.msra.mxu0 0
    %789 = vmatprep.subr.bf16.mxu0 0
    %790 = vmatpush2.bf16.msra.mxu0 0
    %791 = vmatprep.mubr.bf16.mxu0 0
    %792 = vmatmul.mubr.bf16.gmra.mxu0 %v758
    %v793 = vpop.f32.mrf.mxu0
    %v794 = vadd.f32 0.0, %v793
    %v795 = vpop.f32.mrf.mxu0
    %v796 = vpop.f32.mrf.mxu0
    %v797 = vpop.f32.mrf.mxu0
    %798 = vdwg.mxu0
    %v799 = vadd.f32 %v753, %v794
    %v800 = vtanh.pop %v799
    %v803 = vunpack.c.l.s4 1966171168
    %v804 = vunpack.c.0.s8 %v803
    %v805 = vlaneseq
    %v806 = vshrl.u32 %v805, 7
    %v807 = vsub.s32 %v804, %v806
    %v808 = vrot.slane %v800, %v807
    %v809 = vcombine.high %v808, %v808
    %v811 = vunpack.c.l.s4 1966171168
    %v812 = vunpack.c.0.s8 %v811
    %v813 = vlaneseq
    %v814 = vshrl.u32 %v813, 7
    %v815 = vsub.s32 %v812, %v814
    %v816 = vrot.slane %v808, %v815
    %v818 = vunpack.c.l.s4 1966171168
    %v819 = vunpack.c.0.s8 %v818
    %v820 = vlaneseq
    %v821 = vshrl.u32 %v820, 7
    %v822 = vsub.s32 %v819, %v821
    %v823 = vrot.slane %v809, %v822
    %826 = vst [vmem:[#allocation11 + $0x4] sm:$0x1] %v816
    %827 = vst [vmem:[#allocation11 + $0xc] sm:$0x1] %v823
    %v828 = vld [vmem:[#allocation3 + $0x5] sm:$0x1]
    %v829 = vld [vmem:[#allocation3 + $0xd] sm:$0x1]
    %v830 = vpack.c.bf16 %v828, %v828
    %v831 = vpack.c.bf16 %v829, %v829
    %v834 = vunpack.c.l.b16 %v830
    %v835 = vunpack.c.l.b16 %v831
    %v836 = vrot.slane %v835, 7
    %v837 = vsel %vm130, %v836, %v834
    %v838 = vpack.c.b16 %v837, %v837
    %840 = vmatprep.subr.bf16.mxu0 0
    %841 = vmatpush1.bf16.msra.mxu0 %v173
    %842 = vmatprep.subr.bf16.mxu0 0
    %843 = vmatpush1.bf16.msra.mxu0 %v172
    %844 = vmatprep.subr.bf16.mxu0 0
    %845 = vmatpush1.bf16.msra.mxu0 %v171
    %846 = vmatprep.subr.bf16.mxu0 0
    %847 = vmatpush1.bf16.msra.mxu0 %v170
    %848 = vmatprep.subr.bf16.mxu0 0
    %849 = vmatpush1.bf16.msra.mxu0 %v169
    %850 = vmatprep.subr.bf16.mxu0 0
    %851 = vmatpush1.bf16.msra.mxu0 %v168
    %852 = vmatprep.subr.bf16.mxu0 0
    %853 = vmatpush1.bf16.msra.mxu0 %v167
    %854 = vmatprep.subr.bf16.mxu0 0
    %855 = vmatpush1.bf16.msra.mxu0 %v166
    %856 = vmatprep.subr.bf16.mxu0 0
    %857 = vmatpush2.bf16.msra.mxu0 0
    %858 = vmatprep.subr.bf16.mxu0 0
    %859 = vmatpush2.bf16.msra.mxu0 0
    %860 = vmatprep.subr.bf16.mxu0 0
    %861 = vmatpush2.bf16.msra.mxu0 0
    %862 = vmatprep.subr.bf16.mxu0 0
    %863 = vmatpush2.bf16.msra.mxu0 0
    %864 = vmatprep.subr.bf16.mxu0 0
    %865 = vmatpush2.bf16.msra.mxu0 0
    %866 = vmatprep.subr.bf16.mxu0 0
    %867 = vmatpush2.bf16.msra.mxu0 0
    %868 = vmatprep.subr.bf16.mxu0 0
    %869 = vmatpush2.bf16.msra.mxu0 0
    %870 = vmatprep.subr.bf16.mxu0 0
    %871 = vmatpush2.bf16.msra.mxu0 0
    %872 = vmatprep.mubr.bf16.mxu0 0
    %873 = vmatmul.mubr.bf16.gmra.mxu0 %v838
    %v874 = vpop.f32.mrf.mxu0
    %v875 = vadd.f32 %v118, %v874
    %v876 = vpop.f32.mrf.mxu0
    %v877 = vpop.f32.mrf.mxu0
    %v878 = vpop.f32.mrf.mxu0
    %879 = vdwg.mxu0
    %v880 = vpack.c.bf16 %v800, %v800
    %881 = vmatprep.subr.bf16.mxu0 0
    %882 = vmatpush1.bf16.msra.mxu0 %v262
    %883 = vmatprep.subr.bf16.mxu0 0
    %884 = vmatpush1.bf16.msra.mxu0 %v261
    %885 = vmatprep.subr.bf16.mxu0 0
    %886 = vmatpush1.bf16.msra.mxu0 %v260
    %887 = vmatprep.subr.bf16.mxu0 0
    %888 = vmatpush1.bf16.msra.mxu0 %v259
    %889 = vmatprep.subr.bf16.mxu0 0
    %890 = vmatpush1.bf16.msra.mxu0 %v258
    %891 = vmatprep.subr.bf16.mxu0 0
    %892 = vmatpush1.bf16.msra.mxu0 %v257
    %893 = vmatprep.subr.bf16.mxu0 0
    %894 = vmatpush1.bf16.msra.mxu0 %v256
    %895 = vmatprep.subr.bf16.mxu0 0
    %896 = vmatpush1.bf16.msra.mxu0 %v255
    %897 = vmatprep.subr.bf16.mxu0 0
    %898 = vmatpush2.bf16.msra.mxu0 0
    %899 = vmatprep.subr.bf16.mxu0 0
    %900 = vmatpush2.bf16.msra.mxu0 0
    %901 = vmatprep.subr.bf16.mxu0 0
    %902 = vmatpush2.bf16.msra.mxu0 0
    %903 = vmatprep.subr.bf16.mxu0 0
    %904 = vmatpush2.bf16.msra.mxu0 0
    %905 = vmatprep.subr.bf16.mxu0 0
    %906 = vmatpush2.bf16.msra.mxu0 0
    %907 = vmatprep.subr.bf16.mxu0 0
    %908 = vmatpush2.bf16.msra.mxu0 0
    %909 = vmatprep.subr.bf16.mxu0 0
    %910 = vmatpush2.bf16.msra.mxu0 0
    %911 = vmatprep.subr.bf16.mxu0 0
    %912 = vmatpush2.bf16.msra.mxu0 0
    %913 = vmatprep.mubr.bf16.mxu0 0
    %914 = vmatmul.mubr.bf16.gmra.mxu0 %v880
    %v915 = vpop.f32.mrf.mxu0
    %v916 = vadd.f32 0.0, %v915
    %v917 = vpop.f32.mrf.mxu0
    %v918 = vpop.f32.mrf.mxu0
    %v919 = vpop.f32.mrf.mxu0
    %920 = vdwg.mxu0
    %v921 = vadd.f32 %v875, %v916
    %v922 = vtanh.pop %v921
    %v925 = vunpack.c.l.s4 1966171168
    %v926 = vunpack.c.0.s8 %v925
    %v927 = vlaneseq
    %v928 = vshrl.u32 %v927, 7
    %v929 = vsub.s32 %v926, %v928
    %v930 = vrot.slane %v922, %v929
    %v931 = vcombine.high %v930, %v930
    %v933 = vunpack.c.l.s4 1966171168
    %v934 = vunpack.c.0.s8 %v933
    %v935 = vlaneseq
    %v936 = vshrl.u32 %v935, 7
    %v937 = vsub.s32 %v934, %v936
    %v938 = vrot.slane %v930, %v937
    %v940 = vunpack.c.l.s4 1966171168
    %v941 = vunpack.c.0.s8 %v940
    %v942 = vlaneseq
    %v943 = vshrl.u32 %v942, 7
    %v944 = vsub.s32 %v941, %v943
    %v945 = vrot.slane %v931, %v944
    %948 = vst [vmem:[#allocation11 + $0x5] sm:$0x1] %v938
    %949 = vst [vmem:[#allocation11 + $0xd] sm:$0x1] %v945
    %v950 = vld [vmem:[#allocation3 + $0x6] sm:$0x1]
    %v951 = vld [vmem:[#allocation3 + $0xe] sm:$0x1]
    %v952 = vpack.c.bf16 %v950, %v950
    %v953 = vpack.c.bf16 %v951, %v951
    %v956 = vunpack.c.l.b16 %v952
    %v957 = vunpack.c.l.b16 %v953
    %v958 = vrot.slane %v957, 7
    %v959 = vsel %vm130, %v958, %v956
    %v960 = vpack.c.b16 %v959, %v959
    %962 = vmatprep.subr.bf16.mxu0 0
    %963 = vmatpush1.bf16.msra.mxu0 %v173
    %964 = vmatprep.subr.bf16.mxu0 0
    %965 = vmatpush1.bf16.msra.mxu0 %v172
    %966 = vmatprep.subr.bf16.mxu0 0
    %967 = vmatpush1.bf16.msra.mxu0 %v171
    %968 = vmatprep.subr.bf16.mxu0 0
    %969 = vmatpush1.bf16.msra.mxu0 %v170
    %970 = vmatprep.subr.bf16.mxu0 0
    %971 = vmatpush1.bf16.msra.mxu0 %v169
    %972 = vmatprep.subr.bf16.mxu0 0
    %973 = vmatpush1.bf16.msra.mxu0 %v168
    %974 = vmatprep.subr.bf16.mxu0 0
    %975 = vmatpush1.bf16.msra.mxu0 %v167
    %976 = vmatprep.subr.bf16.mxu0 0
    %977 = vmatpush1.bf16.msra.mxu0 %v166
    %978 = vmatprep.subr.bf16.mxu0 0
    %979 = vmatpush2.bf16.msra.mxu0 0
    %980 = vmatprep.subr.bf16.mxu0 0
    %981 = vmatpush2.bf16.msra.mxu0 0
    %982 = vmatprep.subr.bf16.mxu0 0
    %983 = vmatpush2.bf16.msra.mxu0 0
    %984 = vmatprep.subr.bf16.mxu0 0
    %985 = vmatpush2.bf16.msra.mxu0 0
    %986 = vmatprep.subr.bf16.mxu0 0
    %987 = vmatpush2.bf16.msra.mxu0 0
    %988 = vmatprep.subr.bf16.mxu0 0
    %989 = vmatpush2.bf16.msra.mxu0 0
    %990 = vmatprep.subr.bf16.mxu0 0
    %991 = vmatpush2.bf16.msra.mxu0 0
    %992 = vmatprep.subr.bf16.mxu0 0
    %993 = vmatpush2.bf16.msra.mxu0 0
    %994 = vmatprep.mubr.bf16.mxu0 0
    %995 = vmatmul.mubr.bf16.gmra.mxu0 %v960
    %v996 = vpop.f32.mrf.mxu0
    %v997 = vadd.f32 %v118, %v996
    %v998 = vpop.f32.mrf.mxu0
    %v999 = vpop.f32.mrf.mxu0
    %v1000 = vpop.f32.mrf.mxu0
    %1001 = vdwg.mxu0
    %v1002 = vpack.c.bf16 %v922, %v922
    %1003 = vmatprep.subr.bf16.mxu0 0
    %1004 = vmatpush1.bf16.msra.mxu0 %v262
    %1005 = vmatprep.subr.bf16.mxu0 0
    %1006 = vmatpush1.bf16.msra.mxu0 %v261
    %1007 = vmatprep.subr.bf16.mxu0 0
    %1008 = vmatpush1.bf16.msra.mxu0 %v260
    %1009 = vmatprep.subr.bf16.mxu0 0
    %1010 = vmatpush1.bf16.msra.mxu0 %v259
    %1011 = vmatprep.subr.bf16.mxu0 0
    %1012 = vmatpush1.bf16.msra.mxu0 %v258
    %1013 = vmatprep.subr.bf16.mxu0 0
    %1014 = vmatpush1.bf16.msra.mxu0 %v257
    %1015 = vmatprep.subr.bf16.mxu0 0
    %1016 = vmatpush1.bf16.msra.mxu0 %v256
    %1017 = vmatprep.subr.bf16.mxu0 0
    %1018 = vmatpush1.bf16.msra.mxu0 %v255
    %1019 = vmatprep.subr.bf16.mxu0 0
    %1020 = vmatpush2.bf16.msra.mxu0 0
    %1021 = vmatprep.subr.bf16.mxu0 0
    %1022 = vmatpush2.bf16.msra.mxu0 0
    %1023 = vmatprep.subr.bf16.mxu0 0
    %1024 = vmatpush2.bf16.msra.mxu0 0
    %1025 = vmatprep.subr.bf16.mxu0 0
    %1026 = vmatpush2.bf16.msra.mxu0 0
    %1027 = vmatprep.subr.bf16.mxu0 0
    %1028 = vmatpush2.bf16.msra.mxu0 0
    %1029 = vmatprep.subr.bf16.mxu0 0
    %1030 = vmatpush2.bf16.msra.mxu0 0
    %1031 = vmatprep.subr.bf16.mxu0 0
    %1032 = vmatpush2.bf16.msra.mxu0 0
    %1033 = vmatprep.subr.bf16.mxu0 0
    %1034 = vmatpush2.bf16.msra.mxu0 0
    %1035 = vmatprep.mubr.bf16.mxu0 0
    %1036 = vmatmul.mubr.bf16.gmra.mxu0 %v1002
    %v1037 = vpop.f32.mrf.mxu0
    %v1038 = vadd.f32 0.0, %v1037
    %v1039 = vpop.f32.mrf.mxu0
    %v1040 = vpop.f32.mrf.mxu0
    %v1041 = vpop.f32.mrf.mxu0
    %1042 = vdwg.mxu0
    %v1043 = vadd.f32 %v997, %v1038
    %v1044 = vtanh.pop %v1043
    %v1047 = vunpack.c.l.s4 1966171168
    %v1048 = vunpack.c.0.s8 %v1047
    %v1049 = vlaneseq
    %v1050 = vshrl.u32 %v1049, 7
    %v1051 = vsub.s32 %v1048, %v1050
    %v1052 = vrot.slane %v1044, %v1051
    %v1053 = vcombine.high %v1052, %v1052
    %v1055 = vunpack.c.l.s4 1966171168
    %v1056 = vunpack.c.0.s8 %v1055
    %v1057 = vlaneseq
    %v1058 = vshrl.u32 %v1057, 7
    %v1059 = vsub.s32 %v1056, %v1058
    %v1060 = vrot.slane %v1052, %v1059
    %v1062 = vunpack.c.l.s4 1966171168
    %v1063 = vunpack.c.0.s8 %v1062
    %v1064 = vlaneseq
    %v1065 = vshrl.u32 %v1064, 7
    %v1066 = vsub.s32 %v1063, %v1065
    %v1067 = vrot.slane %v1053, %v1066
    %1070 = vst [vmem:[#allocation11 + $0x6] sm:$0x1] %v1060
    %1071 = vst [vmem:[#allocation11 + $0xe] sm:$0x1] %v1067
    %v1072 = vld [vmem:[#allocation3 + $0x7] sm:$0x1]
    %v1073 = vld [vmem:[#allocation3 + $0xf] sm:$0x1]
    %v1074 = vpack.c.bf16 %v1072, %v1072
    %v1075 = vpack.c.bf16 %v1073, %v1073
    %v1078 = vunpack.c.l.b16 %v1074
    %v1079 = vunpack.c.l.b16 %v1075
    %v1080 = vrot.slane %v1079, 7
    %v1081 = vsel %vm130, %v1080, %v1078
    %v1082 = vpack.c.b16 %v1081, %v1081
    %1084 = vmatprep.subr.bf16.mxu0 0
    %1085 = vmatpush1.bf16.msra.mxu0 %v173
    %1086 = vmatprep.subr.bf16.mxu0 0
    %1087 = vmatpush1.bf16.msra.mxu0 %v172
    %1088 = vmatprep.subr.bf16.mxu0 0
    %1089 = vmatpush1.bf16.msra.mxu0 %v171
    %1090 = vmatprep.subr.bf16.mxu0 0
    %1091 = vmatpush1.bf16.msra.mxu0 %v170
    %1092 = vmatprep.subr.bf16.mxu0 0
    %1093 = vmatpush1.bf16.msra.mxu0 %v169
    %1094 = vmatprep.subr.bf16.mxu0 0
    %1095 = vmatpush1.bf16.msra.mxu0 %v168
    %1096 = vmatprep.subr.bf16.mxu0 0
    %1097 = vmatpush1.bf16.msra.mxu0 %v167
    %1098 = vmatprep.subr.bf16.mxu0 0
    %1099 = vmatpush1.bf16.msra.mxu0 %v166
    %1100 = vmatprep.subr.bf16.mxu0 0
    %1101 = vmatpush2.bf16.msra.mxu0 0
    %1102 = vmatprep.subr.bf16.mxu0 0
    %1103 = vmatpush2.bf16.msra.mxu0 0
    %1104 = vmatprep.subr.bf16.mxu0 0
    %1105 = vmatpush2.bf16.msra.mxu0 0
    %1106 = vmatprep.subr.bf16.mxu0 0
    %1107 = vmatpush2.bf16.msra.mxu0 0
    %1108 = vmatprep.subr.bf16.mxu0 0
    %1109 = vmatpush2.bf16.msra.mxu0 0
    %1110 = vmatprep.subr.bf16.mxu0 0
    %1111 = vmatpush2.bf16.msra.mxu0 0
    %1112 = vmatprep.subr.bf16.mxu0 0
    %1113 = vmatpush2.bf16.msra.mxu0 0
    %1114 = vmatprep.subr.bf16.mxu0 0
    %1115 = vmatpush2.bf16.msra.mxu0 0
    %1116 = vmatprep.mubr.bf16.mxu0 0
    %1117 = vmatmul.mubr.bf16.gmra.mxu0 %v1082
    %v1118 = vpop.f32.mrf.mxu0
    %v1119 = vadd.f32 %v118, %v1118
    %v1120 = vpop.f32.mrf.mxu0
    %v1121 = vpop.f32.mrf.mxu0
    %v1122 = vpop.f32.mrf.mxu0
    %1123 = vdwg.mxu0
    %v1124 = vpack.c.bf16 %v1044, %v1044
    %1125 = vmatprep.subr.bf16.mxu0 0
    %1126 = vmatpush1.bf16.msra.mxu0 %v262
    %1127 = vmatprep.subr.bf16.mxu0 0
    %1128 = vmatpush1.bf16.msra.mxu0 %v261
    %1129 = vmatprep.subr.bf16.mxu0 0
    %1130 = vmatpush1.bf16.msra.mxu0 %v260
    %1131 = vmatprep.subr.bf16.mxu0 0
    %1132 = vmatpush1.bf16.msra.mxu0 %v259
    %1133 = vmatprep.subr.bf16.mxu0 0
    %1134 = vmatpush1.bf16.msra.mxu0 %v258
    %1135 = vmatprep.subr.bf16.mxu0 0
    %1136 = vmatpush1.bf16.msra.mxu0 %v257
    %1137 = vmatprep.subr.bf16.mxu0 0
    %1138 = vmatpush1.bf16.msra.mxu0 %v256
    %1139 = vmatprep.subr.bf16.mxu0 0
    %1140 = vmatpush1.bf16.msra.mxu0 %v255
    %1141 = vmatprep.subr.bf16.mxu0 0
    %1142 = vmatpush2.bf16.msra.mxu0 0
    %1143 = vmatprep.subr.bf16.mxu0 0
    %1144 = vmatpush2.bf16.msra.mxu0 0
    %1145 = vmatprep.subr.bf16.mxu0 0
    %1146 = vmatpush2.bf16.msra.mxu0 0
    %1147 = vmatprep.subr.bf16.mxu0 0
    %1148 = vmatpush2.bf16.msra.mxu0 0
    %1149 = vmatprep.subr.bf16.mxu0 0
    %1150 = vmatpush2.bf16.msra.mxu0 0
    %1151 = vmatprep.subr.bf16.mxu0 0
    %1152 = vmatpush2.bf16.msra.mxu0 0
    %1153 = vmatprep.subr.bf16.mxu0 0
    %1154 = vmatpush2.bf16.msra.mxu0 0
    %1155 = vmatprep.subr.bf16.mxu0 0
    %1156 = vmatpush2.bf16.msra.mxu0 0
    %1157 = vmatprep.mubr.bf16.mxu0 0
    %1158 = vmatmul.mubr.bf16.gmra.mxu0 %v1124
    %v1159 = vpop.f32.mrf.mxu0
    %v1160 = vadd.f32 0.0, %v1159
    %v1161 = vpop.f32.mrf.mxu0
    %v1162 = vpop.f32.mrf.mxu0
    %v1163 = vpop.f32.mrf.mxu0
    %1164 = vdwg.mxu0
    %v1165 = vadd.f32 %v1119, %v1160
    %v1166 = vtanh.pop %v1165
    %v1169 = vunpack.c.l.s4 1966171168
    %v1170 = vunpack.c.0.s8 %v1169
    %v1171 = vlaneseq
    %v1172 = vshrl.u32 %v1171, 7
    %v1173 = vsub.s32 %v1170, %v1172
    %v1174 = vrot.slane %v1166, %v1173
    %v1175 = vcombine.high %v1174, %v1174
    %v1177 = vunpack.c.l.s4 1966171168
    %v1178 = vunpack.c.0.s8 %v1177
    %v1179 = vlaneseq
    %v1180 = vshrl.u32 %v1179, 7
    %v1181 = vsub.s32 %v1178, %v1180
    %v1182 = vrot.slane %v1174, %v1181
    %v1184 = vunpack.c.l.s4 1966171168
    %v1185 = vunpack.c.0.s8 %v1184
    %v1186 = vlaneseq
    %v1187 = vshrl.u32 %v1186, 7
    %v1188 = vsub.s32 %v1185, %v1187
    %v1189 = vrot.slane %v1175, %v1188
    %1192 = vst [vmem:[#allocation11 + $0x7] sm:$0x1] %v1182
    %1193 = vst [vmem:[#allocation11 + $0xf] sm:$0x1] %v1189
    %1194 = vst [vmem:[#allocation2] sm:$0x3] %v1166
    // Predicated region
    $region42: #{tpu_custom_call.1} parent=1 // pred_check
      _
    $region43: #{tpu_custom_call.1} parent=1 // pred_check_branch
      %1196 = sbr.rel (0) target = $region45
    $region44: #{tpu_custom_call.1} parent=1 // pred_region
      %s1198 = ssub.s32 256, 256
      %1199 = vsyncadd [#allocation5], %s1198
      %s1200 = sshll.u32 [#allocation11], 4
      %s1201 = int_to_ptr.vmem [resolvable:$true] %s1200
      %1206 = dma.vmem_to_hbm [thread:$0]  %s1201, 256, %s5, [#allocation5], 128, 128, 8
    $region45: #{tpu_custom_call.1} parent=1 // pred_fallthru
      _
    // Predicated region
    $region46: #{tpu_custom_call.1} parent=1 // pred_check
      _
    $region47: #{tpu_custom_call.1} parent=1 // pred_check_branch
      %1208 = sbr.rel (0) target = $region49
    $region48: #{tpu_custom_call.1} parent=1 // pred_region
      %1209 = dma.done [#allocation5], 256
    $region49: #{tpu_custom_call.1} parent=1 // pred_fallthru
      _
    %1210 = vsyncpa [#allocation4], 1
    %1211 = vsyncpa [#allocation7], 1
    %1212 = vsyncpa [#allocation10], 1
    %1213 = vsyncpa [#allocation5], 1

</llo_original>
